<compile_context>
chip_gen: v5e
topology: v5e:2x2
jax: 0.10.0
libtpu: 0.0.40
codegen_flags: <defaults>
</compile_context>

<pallas_src>
import functools

import jax
import jax.numpy as jnp
import numpy as np
from jax.experimental import pallas as pl
from jax.experimental.pallas import tpu as pltpu


def _gcn_gate_aspect_kernel(
    feat_ref,      # (BT*L, D)        bf16  sentence embeddings (tile, flattened)
    adj_ref,       # (BT*L, BT*L)     bf16  block-diagonal sentence adjacency
    asp_ref,       # (BT*La, D)       bf16  aspect embeddings (tile, flattened)
    adja_ref,      # (BT*La, BT*La)   bf16  block-diagonal aspect adjacency
    w12_ref,       # (D, 2D) bf16  gc1 | gc2 fused weights
    b12_ref,       # (1, 2D) f32   gc1 | gc2 fused bias
    w3_ref,        # (D, D)  bf16  gc3 weight
    b3_ref,        # (1, D)  f32
    wfa_ref,       # (D, D)  bf16  fc_aspect weight
    bfa_ref,       # (1, D)  f32
    wfc_ref,       # (D, C)  bf16  fc1 weight
    bfc_ref,       # (1, C)  f32
    packed_ref,    # (BT, P) f32   out: [xpool | logit | zero pad]
    y_ref,         # (L, BT*D) bf16 out: y, element b in lanes [b*D, (b+1)*D)
    *, BT, L, La,
):
    D = w3_ref.shape[0]
    C = wfc_ref.shape[1]
    P = packed_ref.shape[1]

    # ---- batched input-side projections (bf16 operands, f32 accumulation) ---
    # gc1/gc2 fused: one (BT*L, D) x (D, 2D) MXU pass instead of two 64-wide.
    h12 = jnp.dot(feat_ref[...], w12_ref[...],
                  preferred_element_type=jnp.float32).astype(jnp.bfloat16)
    h3 = jnp.dot(asp_ref[...], w3_ref[...],
                 preferred_element_type=jnp.float32).astype(jnp.bfloat16)

    adj_bd = adj_ref[...]
    adja_bd = adja_ref[...]

    # ---- batched degree normalization (one XLU reduce + one EUP pass each) --
    # Off-block entries of the block-diagonal matrix are zero, so row sums
    # equal the original per-element row sums.  The "+ 1.0" also keeps padded
    # (all-zero) batch rows well-defined -- do not remove it.
    inv = pl.reciprocal(
        jnp.sum(adj_bd.astype(jnp.float32), axis=-1, keepdims=True) + 1.0,
        approx=True)
    inv_a = pl.reciprocal(
        jnp.sum(adja_bd.astype(jnp.float32), axis=-1, keepdims=True) + 1.0,
        approx=True)

    # ---- aspect path: one block-diagonal graph conv for the whole tile ------
    # TODO(synk): reference calls `F.relu(self.gc3(aspect_v), adj)` (gc3 is
    # missing the adj argument); interpreted as relu(gc3(aspect_v, adj_aspect))
    # with max over the aspect sequence axis (GCAE intent).
    ga = jnp.dot(adja_bd, h3,
                 preferred_element_type=jnp.float32) * inv_a + b3_ref[...]
    aa = jnp.maximum(ga, 0.0)                                       # (BT*La, D)
    asp_pool = jnp.concatenate(
        [jnp.max(aa[b * La:(b + 1) * La], axis=0, keepdims=True)
         for b in range(BT)], axis=0)                               # (BT, D)

    # fc_aspect batched over the tile (M=BT) instead of BT separate M=1 dots.
    asp_fc = jnp.dot(asp_pool.astype(jnp.bfloat16), wfa_ref[...],
                     preferred_element_type=jnp.float32) + bfa_ref[...]

    # ---- sentence path: fused gc1/gc2 block-diagonal graph conv, gate, pool -
    g12 = jnp.dot(adj_bd, h12,
                  preferred_element_type=jnp.float32) * inv + b12_ref[...]
    x_full = jnp.tanh(g12[:, :D])                                   # gc1 branch
    g2_full = g12[:, D:]                                            # gc2 branch

    # Remaining per-b loop is elementwise/pooling only (no matmuls, no stores);
    # cheap at BT=4.  TODO(synk): if block_b grows beyond ~8, batch this with a
    # (BT, L, D) reshape or a lax.fori_loop to bound vreg live ranges.
    y_parts = []
    xpool_rows = []
    for b in range(BT):  # compile-time unrolled -> static sublane slices
        # TODO(synk): reference adds fc_aspect(aspect_v) without unsqueeze;
        # broadcast across the sequence dimension here (GCAE intent).
        y_b = jnp.maximum(g2_full[b * L:(b + 1) * L] + asp_fc[b:b + 1, :], 0.0)
        gated_b = x_full[b * L:(b + 1) * L] * y_b
        xpool_rows.append(jnp.max(gated_b, axis=0, keepdims=True))  # (1, D)
        y_parts.append(y_b)                                         # (L, D)
    xpool = jnp.concatenate(xpool_rows, axis=0)                     # (BT, D)

    # Single lane-dense y store: element b occupies lanes [b*D, (b+1)*D).
    y_ref[...] = jnp.concatenate(y_parts, axis=-1).astype(y_ref.dtype)

    # Dropout(0.2) is identity at inference time.
    logit = jnp.dot(xpool.astype(jnp.bfloat16), wfc_ref[...],
                    preferred_element_type=jnp.float32) + bfc_ref[...]  # (BT, C)

    # single lane-dense (BT, P) store: [xpool | logit | zero pad]
    parts = [xpool, logit]
    if P > D + C:
        parts.append(jnp.zeros((BT, P - D - C), jnp.float32))
    packed_ref[...] = jnp.concatenate(parts, axis=-1)


def gcn_gate_aspect_forward(feat_emb, aspect_emb, adj, adj_aspect, params,
                            *, block_b=4):
    """Fused forward. Returns (logit (B,C) f32, x_pooled (B,D) f32, y (B,L,D) bf16)."""
    B, L, D = feat_emb.shape
    _, La, _ = aspect_emb.shape
    C = params["w_fc1"].shape[1]

    BT = min(block_b, B)
    T = pl.cdiv(B, BT)
    Bp = T * BT
    if Bp != B:                       # pad batch to a multiple of the tile
        padb = Bp - B
        feat_emb = jnp.pad(feat_emb, ((0, padb), (0, 0), (0, 0)))
        aspect_emb = jnp.pad(aspect_emb, ((0, padb), (0, 0), (0, 0)))
        adj = jnp.pad(adj, ((0, padb), (0, 0), (0, 0)))
        adj_aspect = jnp.pad(adj_aspect, ((0, padb), (0, 0), (0, 0)))

    # bf16 matmul operands; biases stay f32 and are added to f32 accumulators.
    bf16 = jnp.bfloat16
    feat_t = feat_emb.astype(bf16).reshape(T, BT * L, D)
    asp_t = aspect_emb.astype(bf16).reshape(T, BT * La, D)

    def _block_diag(a, S):
        # (Bp, S, S) -> (T, BT*S, BT*S) per-tile block diagonal (wrapper glue;
        # a few KiB at these sizes, buys one deep MXU matmul per tile).
        a = a.astype(bf16).reshape(T, BT, S, S)
        eye = jnp.eye(BT, dtype=bf16)
        bd = a[:, :, :, None, :] * eye[None, :, None, :, None]   # (T,BT,S,BT,S)
        return bd.reshape(T, BT * S, BT * S)

    adj_bd = _block_diag(adj, L)
    adja_bd = _block_diag(adj_aspect, La)

    # Fuse gc1 || gc2 into a single 2D-wide (128-lane at D=64) weight/bias.
    w12 = jnp.concatenate([params["w_gc1"], params["w_gc2"]], axis=1).astype(bf16)
    b12 = jnp.concatenate([params["b_gc1"], params["b_gc2"]], axis=1)
    w3 = params["w_gc3"].astype(bf16)
    wfa = params["w_fa"].astype(bf16)
    wfc = params["w_fc1"].astype(bf16)

    P = pl.cdiv(D + C, 128) * 128     # packed xpool|logit lane width

    full2d = lambda shape: pl.BlockSpec(shape, lambda t: (0, 0))

    in_specs = [
        pl.BlockSpec((None, BT * L, D), lambda t: (t, 0, 0)),           # feat
        pl.BlockSpec((None, BT * L, BT * L), lambda t: (t, 0, 0)),      # adj (block-diag)
        pl.BlockSpec((None, BT * La, D), lambda t: (t, 0, 0)),          # aspect
        pl.BlockSpec((None, BT * La, BT * La), lambda t: (t, 0, 0)),    # adj_aspect (block-diag)
        full2d((D, 2 * D)), full2d((1, 2 * D)),                         # gc1|gc2 fused
        full2d((D, D)), full2d((1, D)),                                 # gc3
        full2d((D, D)), full2d((1, D)),                                 # fc_aspect
        full2d((D, C)), full2d((1, C)),                                 # fc1
    ]
    out_specs = [
        pl.BlockSpec((None, BT, P), lambda t: (t, 0, 0)),               # xpool|logit
        pl.BlockSpec((None, L, BT * D), lambda t: (t, 0, 0)),           # y (lane-packed)
    ]
    out_shape = [
        jax.ShapeDtypeStruct((T, BT, P), jnp.float32),
        jax.ShapeDtypeStruct((T, L, BT * D), jnp.bfloat16),             # bf16 writeback
    ]

    kernel = functools.partial(_gcn_gate_aspect_kernel, BT=BT, L=L, La=La)

    packed, y_packed = pl.pallas_call(
        kernel,
        grid=(T,),
        in_specs=in_specs,
        out_specs=out_specs,
        out_shape=out_shape,
        compiler_params=pltpu.CompilerParams(
            dimension_semantics=("parallel",)),    # >=2 steps -> both v7x TCs
    )(
        feat_t, adj_bd, asp_t, adja_bd,
        w12, b12, w3, params["b_gc3"],
        wfa, params["b_fa"], wfc, params["b_fc1"],
    )

    # Unpack the lane-dense outputs (wrapper-side layout plumbing only).
    packed = packed.reshape(Bp, P)
    x_pooled = packed[:B, :D]
    logit = packed[:B, D:D + C]
    y = (y_packed.reshape(T, L, BT, D)
                 .transpose(0, 2, 1, 3)
                 .reshape(Bp, L, D)[:B])           # bf16
    return logit, x_pooled, y


def init_params(key, D, C):
    # TODO(synk): reference declares GraphConvolution(2*D, 2*D), Linear(100, Co)
    # and Linear(len(Ks)*Co, C) with mutually inconsistent dims; unified to a
    # single hidden dim D so the forward is well-formed.
    ks = jax.random.split(key, 10)
    sc = 0.1
    return {
        "w_gc1": sc * jax.random.normal(ks[0], (D, D), jnp.float32),
        "b_gc1": sc * jax.random.normal(ks[1], (1, D), jnp.float32),
        "w_gc2": sc * jax.random.normal(ks[2], (D, D), jnp.float32),
        "b_gc2": sc * jax.random.normal(ks[3], (1, D), jnp.float32),
        "w_gc3": sc * jax.random.normal(ks[4], (D, D), jnp.float32),
        "b_gc3": sc * jax.random.normal(ks[5], (1, D), jnp.float32),
        "w_fa": sc * jax.random.normal(ks[6], (D, D), jnp.float32),
        "b_fa": sc * jax.random.normal(ks[7], (1, D), jnp.float32),
        "w_fc1": sc * jax.random.normal(ks[8], (D, C), jnp.float32),
        "b_fc1": sc * jax.random.normal(ks[9], (1, C), jnp.float32),
    }


def _reference_forward(feat, asp, adj, adj_a, p):
    """Pure-JAX f32 reference of the same forward (GraphConvolution math)."""
    den = jnp.sum(adj, axis=-1, keepdims=True) + 1.0
    den_a = jnp.sum(adj_a, axis=-1, keepdims=True) + 1.0
    g1 = jnp.einsum("blk,bkd->bld", adj, feat @ p["w_gc1"]) / den + p["b_gc1"]
    g2 = jnp.einsum("blk,bkd->bld", adj, feat @ p["w_gc2"]) / den + p["b_gc2"]
    aa = jnp.einsum("blk,bkd->bld", adj_a, asp @ p["w_gc3"]) / den_a + p["b_gc3"]
    aa = jnp.maximum(aa, 0.0)
    asp_pool = jnp.max(aa, axis=1)                       # (B, D)
    asp_fc = asp_pool @ p["w_fa"] + p["b_fa"]            # (B, D)
    x = jnp.tanh(g1)
    y = jnp.maximum(g2 + asp_fc[:, None, :], 0.0)
    gated = x * y
    xpool = jnp.max(gated, axis=1)
    logit = xpool @ p["w_fc1"] + p["b_fc1"]
    return logit, xpool, y


if __name__ == "__main__":
    B, L, La = 8, 16, 8     # batch, sentence length, aspect length
    D, C = 64, 3            # hidden/embedding dim, class count
    V, A = 50, 10           # vocab sizes

    key = jax.random.PRNGKey(0)
    k_emb, k_aemb, k_feat, k_asp, k_adj, k_adja, k_par = jax.random.split(key, 7)

    # Embedding tables (nn.Embedding weights), deterministic.
    embed_table = 0.1 * jax.random.normal(k_emb, (V, D), jnp.float32)
    aspect_table = 0.1 * jax.random.normal(k_aemb, (A, D), jnp.float32)

    # Token indices.
    feature_ids = jax.random.randint(k_feat, (B, L), 0, V)
    aspect_ids = jax.random.randint(k_asp, (B, La), 0, A)

    # Adjacency matrices (0/1 + self-loops), float32.
    adj = (jax.random.uniform(k_adj, (B, L, L)) < 0.3).astype(jnp.float32)
    adj = jnp.maximum(adj, jnp.eye(L, dtype=jnp.float32)[None])
    adj_aspect = (jax.random.uniform(k_adja, (B, La, La)) < 0.5).astype(jnp.float32)
    adj_aspect = jnp.maximum(adj_aspect, jnp.eye(La, dtype=jnp.float32)[None])

    # Embedding lookup is gather glue, kept in plain JAX.
    feat_emb = embed_table[feature_ids]      # (B, L, D)
    aspect_emb = aspect_table[aspect_ids]    # (B, La, D)

    params = init_params(k_par, D, C)

    logit, x_pooled, y = gcn_gate_aspect_forward(
        feat_emb, aspect_emb, adj, adj_aspect, params, block_b=4)
    jax.block_until_ready((logit, x_pooled, y))

    assert logit.shape == (B, C)
    assert x_pooled.shape == (B, D)
    assert y.shape == (B, L, D)

    # Loose tolerance: kernel uses bf16 matmul operands, approx reciprocal and
    # a bf16 y writeback.
    ref_logit, ref_xpool, ref_y = _reference_forward(
        feat_emb, aspect_emb, adj, adj_aspect, params)
    np.testing.assert_allclose(np.asarray(y.astype(jnp.float32)),
                               np.asarray(ref_y), atol=5e-2, rtol=5e-2)
    np.testing.assert_allclose(np.asarray(x_pooled), np.asarray(ref_xpool),
                               atol=5e-2, rtol=5e-2)
    np.testing.assert_allclose(np.asarray(logit), np.asarray(ref_logit),
                               atol=5e-2, rtol=5e-2)

    print("KERNEL_OK")
</pallas_src>

<mosaic_0001>
module attributes {stable_mosaic.version = 11 : i64} {
  func.func @_gcn_gate_aspect_kernel(%arg0: i32, %arg1: memref<1x64x64xbf16, #tpu.memory_space<vmem>>, %arg2: memref<1x64x64xbf16, #tpu.memory_space<vmem>>, %arg3: memref<1x32x64xbf16, #tpu.memory_space<vmem>>, %arg4: memref<1x32x32xbf16, #tpu.memory_space<vmem>>, %arg5: memref<64x128xbf16, #tpu.memory_space<vmem>>, %arg6: memref<1x128xf32, #tpu.memory_space<vmem>>, %arg7: memref<64x64xbf16, #tpu.memory_space<vmem>>, %arg8: memref<1x64xf32, #tpu.memory_space<vmem>>, %arg9: memref<64x64xbf16, #tpu.memory_space<vmem>>, %arg10: memref<1x64xf32, #tpu.memory_space<vmem>>, %arg11: memref<64x3xbf16, #tpu.memory_space<vmem>>, %arg12: memref<1x3xf32, #tpu.memory_space<vmem>>, %arg13: memref<1x4x128xf32, #tpu.memory_space<vmem>>, %arg14: memref<1x16x256xbf16, #tpu.memory_space<vmem>>) attributes {dimension_semantics = [#tpu.dimension_semantics<parallel>], iteration_bounds = array<i64: 2>, scalar_prefetch = 0 : i64, scratch_operands = 0 : i64, tpu.core_type = #tpu.core_type<tc>, window_params = [{transform_indices = @transform_0, window_bounds = array<i64: 1, 64, 64>}, {transform_indices = @transform_1, window_bounds = array<i64: 1, 64, 64>}, {transform_indices = @transform_2, window_bounds = array<i64: 1, 32, 64>}, {transform_indices = @transform_3, window_bounds = array<i64: 1, 32, 32>}, {pipeline_mode = #tpu.pipeline_mode<synchronous>, transform_indices = @transform_4, window_bounds = array<i64: 64, 128>}, {pipeline_mode = #tpu.pipeline_mode<synchronous>, transform_indices = @transform_5, window_bounds = array<i64: 1, 128>}, {pipeline_mode = #tpu.pipeline_mode<synchronous>, transform_indices = @transform_6, window_bounds = array<i64: 64, 64>}, {pipeline_mode = #tpu.pipeline_mode<synchronous>, transform_indices = @transform_7, window_bounds = array<i64: 1, 64>}, {pipeline_mode = #tpu.pipeline_mode<synchronous>, transform_indices = @transform_8, window_bounds = array<i64: 64, 64>}, {pipeline_mode = #tpu.pipeline_mode<synchronous>, transform_indices = @transform_9, window_bounds = array<i64: 1, 64>}, {pipeline_mode = #tpu.pipeline_mode<synchronous>, transform_indices = @transform_10, window_bounds = array<i64: 64, 3>}, {pipeline_mode = #tpu.pipeline_mode<synchronous>, transform_indices = @transform_11, window_bounds = array<i64: 1, 3>}, {transform_indices = @transform_12, window_bounds = array<i64: 1, 4, 128>}, {transform_indices = @transform_13, window_bounds = array<i64: 1, 16, 256>}]} {
    %c0 = arith.constant 0 : index
    %c0_0 = arith.constant 0 : index
    %c0_1 = arith.constant 0 : index
    %0 = vector.load %arg1[%c0, %c0_0, %c0_1] : memref<1x64x64xbf16, #tpu.memory_space<vmem>>, vector<1x64x64xbf16>
    %1 = vector.shape_cast %0 : vector<1x64x64xbf16> to vector<64x64xbf16>
    %c0_2 = arith.constant 0 : index
    %c0_3 = arith.constant 0 : index
    %2 = vector.load %arg5[%c0_2, %c0_3] : memref<64x128xbf16, #tpu.memory_space<vmem>>, vector<64x128xbf16>
    %cst = arith.constant dense<0.000000e+00> : vector<64x128xf32>
    %3 = tpu.matmul %1, %2, %cst {dimension_numbers = #tpu.dot_dimension_numbers<[1], [0], [0], [1], [0, 0, 1, 1], [], []>} : vector<64x64xbf16>, vector<64x128xbf16>, vector<64x128xf32> -> vector<64x128xf32>
    %4 = arith.truncf %3 : vector<64x128xf32> to vector<64x128xbf16>
    %c0_4 = arith.constant 0 : index
    %c0_5 = arith.constant 0 : index
    %c0_6 = arith.constant 0 : index
    %5 = vector.load %arg3[%c0_4, %c0_5, %c0_6] : memref<1x32x64xbf16, #tpu.memory_space<vmem>>, vector<1x32x64xbf16>
    %6 = vector.shape_cast %5 : vector<1x32x64xbf16> to vector<32x64xbf16>
    %c0_7 = arith.constant 0 : index
    %c0_8 = arith.constant 0 : index
    %7 = vector.load %arg7[%c0_7, %c0_8] : memref<64x64xbf16, #tpu.memory_space<vmem>>, vector<64x64xbf16>
    %cst_9 = arith.constant dense<0.000000e+00> : vector<32x64xf32>
    %8 = tpu.matmul %6, %7, %cst_9 {dimension_numbers = #tpu.dot_dimension_numbers<[1], [0], [0], [1], [0, 0, 1, 1], [], []>} : vector<32x64xbf16>, vector<64x64xbf16>, vector<32x64xf32> -> vector<32x64xf32>
    %9 = arith.truncf %8 : vector<32x64xf32> to vector<32x64xbf16>
    %c0_10 = arith.constant 0 : index
    %c0_11 = arith.constant 0 : index
    %c0_12 = arith.constant 0 : index
    %10 = vector.load %arg2[%c0_10, %c0_11, %c0_12] : memref<1x64x64xbf16, #tpu.memory_space<vmem>>, vector<1x64x64xbf16>
    %11 = vector.shape_cast %10 : vector<1x64x64xbf16> to vector<64x64xbf16>
    %c0_13 = arith.constant 0 : index
    %c0_14 = arith.constant 0 : index
    %c0_15 = arith.constant 0 : index
    %12 = vector.load %arg4[%c0_13, %c0_14, %c0_15] : memref<1x32x32xbf16, #tpu.memory_space<vmem>>, vector<1x32x32xbf16>
    %13 = vector.shape_cast %12 : vector<1x32x32xbf16> to vector<32x32xbf16>
    %14 = arith.extf %11 : vector<64x64xbf16> to vector<64x64xf32>
    %cst_16 = arith.constant dense<0.000000e+00> : vector<64xf32>
    %15 = vector.multi_reduction <add>, %14, %cst_16 [1] : vector<64x64xf32> to vector<64xf32>
    %16 = vector.shape_cast %15 : vector<64xf32> to vector<64x1xf32>
    %cst_17 = arith.constant 1.000000e+00 : f32
    %17 = vector.broadcast %cst_17 : f32 to vector<64x1xf32>
    %18 = arith.addf %16, %17 : vector<64x1xf32>
    %19 = tpu.reciprocal %18 {approx = true} : vector<64x1xf32> -> vector<64x1xf32>
    %20 = arith.extf %13 : vector<32x32xbf16> to vector<32x32xf32>
    %cst_18 = arith.constant dense<0.000000e+00> : vector<32xf32>
    %21 = vector.multi_reduction <add>, %20, %cst_18 [1] : vector<32x32xf32> to vector<32xf32>
    %22 = vector.shape_cast %21 : vector<32xf32> to vector<32x1xf32>
    %cst_19 = arith.constant 1.000000e+00 : f32
    %23 = vector.broadcast %cst_19 : f32 to vector<32x1xf32>
    %24 = arith.addf %22, %23 : vector<32x1xf32>
    %25 = tpu.reciprocal %24 {approx = true} : vector<32x1xf32> -> vector<32x1xf32>
    %cst_20 = arith.constant dense<0.000000e+00> : vector<32x64xf32>
    %26 = tpu.matmul %13, %9, %cst_20 {dimension_numbers = #tpu.dot_dimension_numbers<[1], [0], [0], [1], [0, 0, 1, 1], [], []>} : vector<32x32xbf16>, vector<32x64xbf16>, vector<32x64xf32> -> vector<32x64xf32>
    %27 = vector.broadcast %25 : vector<32x1xf32> to vector<32x64xf32>
    %28 = arith.mulf %26, %27 : vector<32x64xf32>
    %c0_21 = arith.constant 0 : index
    %c0_22 = arith.constant 0 : index
    %29 = vector.load %arg8[%c0_21, %c0_22] : memref<1x64xf32, #tpu.memory_space<vmem>>, vector<1x64xf32>
    %30 = vector.broadcast %29 : vector<1x64xf32> to vector<32x64xf32>
    %31 = arith.addf %28, %30 : vector<32x64xf32>
    %cst_23 = arith.constant 0.000000e+00 : f32
    %32 = vector.broadcast %cst_23 : f32 to vector<32x64xf32>
    %33 = arith.maximumf %31, %32 : vector<32x64xf32>
    %34 = vector.extract_strided_slice %33 {offsets = [0, 0], sizes = [8, 64], strides = [1, 1]} : vector<32x64xf32> to vector<8x64xf32>
    %cst_24 = arith.constant dense<0xFF800000> : vector<64xf32>
    %35 = vector.multi_reduction <maximumf>, %34, %cst_24 [0] : vector<8x64xf32> to vector<64xf32>
    %36 = vector.shape_cast %35 : vector<64xf32> to vector<1x64xf32>
    %37 = vector.extract_strided_slice %33 {offsets = [8, 0], sizes = [8, 64], strides = [1, 1]} : vector<32x64xf32> to vector<8x64xf32>
    %cst_25 = arith.constant dense<0xFF800000> : vector<64xf32>
    %38 = vector.multi_reduction <maximumf>, %37, %cst_25 [0] : vector<8x64xf32> to vector<64xf32>
    %39 = vector.shape_cast %38 : vector<64xf32> to vector<1x64xf32>
    %40 = vector.extract_strided_slice %33 {offsets = [16, 0], sizes = [8, 64], strides = [1, 1]} : vector<32x64xf32> to vector<8x64xf32>
    %cst_26 = arith.constant dense<0xFF800000> : vector<64xf32>
    %41 = vector.multi_reduction <maximumf>, %40, %cst_26 [0] : vector<8x64xf32> to vector<64xf32>
    %42 = vector.shape_cast %41 : vector<64xf32> to vector<1x64xf32>
    %43 = vector.extract_strided_slice %33 {offsets = [24, 0], sizes = [8, 64], strides = [1, 1]} : vector<32x64xf32> to vector<8x64xf32>
    %cst_27 = arith.constant dense<0xFF800000> : vector<64xf32>
    %44 = vector.multi_reduction <maximumf>, %43, %cst_27 [0] : vector<8x64xf32> to vector<64xf32>
    %45 = vector.shape_cast %44 : vector<64xf32> to vector<1x64xf32>
    %46 = tpu.concatenate %36, %39, %42, %45 in 0 : vector<1x64xf32>, vector<1x64xf32>, vector<1x64xf32>, vector<1x64xf32> -> vector<4x64xf32>
    %47 = arith.truncf %46 : vector<4x64xf32> to vector<4x64xbf16>
    %c0_28 = arith.constant 0 : index
    %c0_29 = arith.constant 0 : index
    %48 = vector.load %arg9[%c0_28, %c0_29] : memref<64x64xbf16, #tpu.memory_space<vmem>>, vector<64x64xbf16>
    %cst_30 = arith.constant dense<0.000000e+00> : vector<4x64xf32>
    %49 = tpu.matmul %47, %48, %cst_30 {dimension_numbers = #tpu.dot_dimension_numbers<[1], [0], [0], [1], [0, 0, 1, 1], [], []>} : vector<4x64xbf16>, vector<64x64xbf16>, vector<4x64xf32> -> vector<4x64xf32>
    %c0_31 = arith.constant 0 : index
    %c0_32 = arith.constant 0 : index
    %50 = vector.load %arg10[%c0_31, %c0_32] : memref<1x64xf32, #tpu.memory_space<vmem>>, vector<1x64xf32>
    %51 = vector.broadcast %50 : vector<1x64xf32> to vector<4x64xf32>
    %52 = arith.addf %49, %51 : vector<4x64xf32>
    %cst_33 = arith.constant dense<0.000000e+00> : vector<64x128xf32>
    %53 = tpu.matmul %11, %4, %cst_33 {dimension_numbers = #tpu.dot_dimension_numbers<[1], [0], [0], [1], [0, 0, 1, 1], [], []>} : vector<64x64xbf16>, vector<64x128xbf16>, vector<64x128xf32> -> vector<64x128xf32>
    %54 = vector.broadcast %19 : vector<64x1xf32> to vector<64x128xf32>
    %55 = arith.mulf %53, %54 : vector<64x128xf32>
    %c0_34 = arith.constant 0 : index
    %c0_35 = arith.constant 0 : index
    %56 = vector.load %arg6[%c0_34, %c0_35] : memref<1x128xf32, #tpu.memory_space<vmem>>, vector<1x128xf32>
    %57 = vector.broadcast %56 : vector<1x128xf32> to vector<64x128xf32>
    %58 = arith.addf %55, %57 : vector<64x128xf32>
    %59 = vector.extract_strided_slice %58 {offsets = [0, 0], sizes = [64, 64], strides = [1, 1]} : vector<64x128xf32> to vector<64x64xf32>
    %60 = math.tanh %59 : vector<64x64xf32>
    %61 = vector.extract_strided_slice %58 {offsets = [0, 64], sizes = [64, 64], strides = [1, 1]} : vector<64x128xf32> to vector<64x64xf32>
    %62 = vector.extract_strided_slice %61 {offsets = [0, 0], sizes = [16, 64], strides = [1, 1]} : vector<64x64xf32> to vector<16x64xf32>
    %63 = vector.extract_strided_slice %52 {offsets = [0, 0], sizes = [1, 64], strides = [1, 1]} : vector<4x64xf32> to vector<1x64xf32>
    %64 = vector.broadcast %63 : vector<1x64xf32> to vector<16x64xf32>
    %65 = arith.addf %62, %64 : vector<16x64xf32>
    %cst_36 = arith.constant 0.000000e+00 : f32
    %66 = vector.broadcast %cst_36 : f32 to vector<16x64xf32>
    %67 = arith.maximumf %65, %66 : vector<16x64xf32>
    %68 = vector.extract_strided_slice %60 {offsets = [0, 0], sizes = [16, 64], strides = [1, 1]} : vector<64x64xf32> to vector<16x64xf32>
    %69 = arith.mulf %68, %67 : vector<16x64xf32>
    %cst_37 = arith.constant dense<0xFF800000> : vector<64xf32>
    %70 = vector.multi_reduction <maximumf>, %69, %cst_37 [0] : vector<16x64xf32> to vector<64xf32>
    %71 = vector.shape_cast %70 : vector<64xf32> to vector<1x64xf32>
    %72 = vector.extract_strided_slice %61 {offsets = [16, 0], sizes = [16, 64], strides = [1, 1]} : vector<64x64xf32> to vector<16x64xf32>
    %73 = vector.extract_strided_slice %52 {offsets = [1, 0], sizes = [1, 64], strides = [1, 1]} : vector<4x64xf32> to vector<1x64xf32>
    %74 = vector.broadcast %73 : vector<1x64xf32> to vector<16x64xf32>
    %75 = arith.addf %72, %74 : vector<16x64xf32>
    %cst_38 = arith.constant 0.000000e+00 : f32
    %76 = vector.broadcast %cst_38 : f32 to vector<16x64xf32>
    %77 = arith.maximumf %75, %76 : vector<16x64xf32>
    %78 = vector.extract_strided_slice %60 {offsets = [16, 0], sizes = [16, 64], strides = [1, 1]} : vector<64x64xf32> to vector<16x64xf32>
    %79 = arith.mulf %78, %77 : vector<16x64xf32>
    %cst_39 = arith.constant dense<0xFF800000> : vector<64xf32>
    %80 = vector.multi_reduction <maximumf>, %79, %cst_39 [0] : vector<16x64xf32> to vector<64xf32>
    %81 = vector.shape_cast %80 : vector<64xf32> to vector<1x64xf32>
    %82 = vector.extract_strided_slice %61 {offsets = [32, 0], sizes = [16, 64], strides = [1, 1]} : vector<64x64xf32> to vector<16x64xf32>
    %83 = vector.extract_strided_slice %52 {offsets = [2, 0], sizes = [1, 64], strides = [1, 1]} : vector<4x64xf32> to vector<1x64xf32>
    %84 = vector.broadcast %83 : vector<1x64xf32> to vector<16x64xf32>
    %85 = arith.addf %82, %84 : vector<16x64xf32>
    %cst_40 = arith.constant 0.000000e+00 : f32
    %86 = vector.broadcast %cst_40 : f32 to vector<16x64xf32>
    %87 = arith.maximumf %85, %86 : vector<16x64xf32>
    %88 = vector.extract_strided_slice %60 {offsets = [32, 0], sizes = [16, 64], strides = [1, 1]} : vector<64x64xf32> to vector<16x64xf32>
    %89 = arith.mulf %88, %87 : vector<16x64xf32>
    %cst_41 = arith.constant dense<0xFF800000> : vector<64xf32>
    %90 = vector.multi_reduction <maximumf>, %89, %cst_41 [0] : vector<16x64xf32> to vector<64xf32>
    %91 = vector.shape_cast %90 : vector<64xf32> to vector<1x64xf32>
    %92 = vector.extract_strided_slice %61 {offsets = [48, 0], sizes = [16, 64], strides = [1, 1]} : vector<64x64xf32> to vector<16x64xf32>
    %93 = vector.extract_strided_slice %52 {offsets = [3, 0], sizes = [1, 64], strides = [1, 1]} : vector<4x64xf32> to vector<1x64xf32>
    %94 = vector.broadcast %93 : vector<1x64xf32> to vector<16x64xf32>
    %95 = arith.addf %92, %94 : vector<16x64xf32>
    %cst_42 = arith.constant 0.000000e+00 : f32
    %96 = vector.broadcast %cst_42 : f32 to vector<16x64xf32>
    %97 = arith.maximumf %95, %96 : vector<16x64xf32>
    %98 = vector.extract_strided_slice %60 {offsets = [48, 0], sizes = [16, 64], strides = [1, 1]} : vector<64x64xf32> to vector<16x64xf32>
    %99 = arith.mulf %98, %97 : vector<16x64xf32>
    %cst_43 = arith.constant dense<0xFF800000> : vector<64xf32>
    %100 = vector.multi_reduction <maximumf>, %99, %cst_43 [0] : vector<16x64xf32> to vector<64xf32>
    %101 = vector.shape_cast %100 : vector<64xf32> to vector<1x64xf32>
    %102 = tpu.concatenate %71, %81, %91, %101 in 0 : vector<1x64xf32>, vector<1x64xf32>, vector<1x64xf32>, vector<1x64xf32> -> vector<4x64xf32>
    %103 = tpu.concatenate %67, %77, %87, %97 in 1 : vector<16x64xf32>, vector<16x64xf32>, vector<16x64xf32>, vector<16x64xf32> -> vector<16x256xf32>
    %104 = arith.truncf %103 : vector<16x256xf32> to vector<16x256xbf16>
    %c0_44 = arith.constant 0 : index
    %c0_45 = arith.constant 0 : index
    %c0_46 = arith.constant 0 : index
    %105 = vector.load %arg14[%c0_44, %c0_45, %c0_46] : memref<1x16x256xbf16, #tpu.memory_space<vmem>>, vector<1x16x256xbf16>
    %106 = vector.shape_cast %105 : vector<1x16x256xbf16> to vector<16x256xbf16>
    %107 = vector.shape_cast %104 : vector<16x256xbf16> to vector<1x16x256xbf16>
    tpu.vector_store %arg14[%c0_44, %c0_45, %c0_46], %107 {strides = array<i32>} : memref<1x16x256xbf16, #tpu.memory_space<vmem>>, vector<1x16x256xbf16>,
    %108 = arith.truncf %102 : vector<4x64xf32> to vector<4x64xbf16>
    %c0_47 = arith.constant 0 : index
    %c0_48 = arith.constant 0 : index
    %109 = vector.load %arg11[%c0_47, %c0_48] : memref<64x3xbf16, #tpu.memory_space<vmem>>, vector<64x3xbf16>
    %cst_49 = arith.constant dense<0.000000e+00> : vector<4x3xf32>
    %110 = tpu.matmul %108, %109, %cst_49 {dimension_numbers = #tpu.dot_dimension_numbers<[1], [0], [0], [1], [0, 0, 1, 1], [], []>} : vector<4x64xbf16>, vector<64x3xbf16>, vector<4x3xf32> -> vector<4x3xf32>
    %c0_50 = arith.constant 0 : index
    %c0_51 = arith.constant 0 : index
    %111 = vector.load %arg12[%c0_50, %c0_51] : memref<1x3xf32, #tpu.memory_space<vmem>>, vector<1x3xf32>
    %112 = vector.broadcast %111 : vector<1x3xf32> to vector<4x3xf32>
    %113 = arith.addf %110, %112 : vector<4x3xf32>
    %cst_52 = arith.constant 0.000000e+00 : f32
    %114 = vector.broadcast %cst_52 : f32 to vector<4x61xf32>
    %115 = tpu.concatenate %102, %113, %114 in 1 : vector<4x64xf32>, vector<4x3xf32>, vector<4x61xf32> -> vector<4x128xf32>
    %c0_53 = arith.constant 0 : index
    %c0_54 = arith.constant 0 : index
    %c0_55 = arith.constant 0 : index
    %116 = vector.load %arg13[%c0_53, %c0_54, %c0_55] : memref<1x4x128xf32, #tpu.memory_space<vmem>>, vector<1x4x128xf32>
    %117 = vector.shape_cast %116 : vector<1x4x128xf32> to vector<4x128xf32>
    %118 = vector.shape_cast %115 : vector<4x128xf32> to vector<1x4x128xf32>
    tpu.vector_store %arg13[%c0_53, %c0_54, %c0_55], %118 {strides = array<i32>} : memref<1x4x128xf32, #tpu.memory_space<vmem>>, vector<1x4x128xf32>,
    return
  }
  func.func @transform_0(%arg0: i32) -> (i32, i32, i32) {
    %c0_i32 = arith.constant 0 : i32
    %c0_i32_0 = arith.constant 0 : i32
    %c0_i32_1 = arith.constant 0 : i32
    return %arg0, %c0_i32, %c0_i32_0 : i32, i32, i32
  }
  func.func @transform_1(%arg0: i32) -> (i32, i32, i32) {
    %c0_i32 = arith.constant 0 : i32
    %c0_i32_0 = arith.constant 0 : i32
    %c0_i32_1 = arith.constant 0 : i32
    return %arg0, %c0_i32, %c0_i32_0 : i32, i32, i32
  }
  func.func @transform_2(%arg0: i32) -> (i32, i32, i32) {
    %c0_i32 = arith.constant 0 : i32
    %c0_i32_0 = arith.constant 0 : i32
    %c0_i32_1 = arith.constant 0 : i32
    return %arg0, %c0_i32, %c0_i32_0 : i32, i32, i32
  }
  func.func @transform_3(%arg0: i32) -> (i32, i32, i32) {
    %c0_i32 = arith.constant 0 : i32
    %c0_i32_0 = arith.constant 0 : i32
    %c0_i32_1 = arith.constant 0 : i32
    return %arg0, %c0_i32, %c0_i32_0 : i32, i32, i32
  }
  func.func @transform_4(%arg0: i32) -> (i32, i32) {
    %c0_i32 = arith.constant 0 : i32
    %c0_i32_0 = arith.constant 0 : i32
    %c0_i32_1 = arith.constant 0 : i32
    return %c0_i32, %c0_i32_0 : i32, i32
  }
  func.func @transform_5(%arg0: i32) -> (i32, i32) {
    %c0_i32 = arith.constant 0 : i32
    %c0_i32_0 = arith.constant 0 : i32
    %c0_i32_1 = arith.constant 0 : i32
    return %c0_i32, %c0_i32_0 : i32, i32
  }
  func.func @transform_6(%arg0: i32) -> (i32, i32) {
    %c0_i32 = arith.constant 0 : i32
    %c0_i32_0 = arith.constant 0 : i32
    %c0_i32_1 = arith.constant 0 : i32
    return %c0_i32, %c0_i32_0 : i32, i32
  }
  func.func @transform_7(%arg0: i32) -> (i32, i32) {
    %c0_i32 = arith.constant 0 : i32
    %c0_i32_0 = arith.constant 0 : i32
    %c0_i32_1 = arith.constant 0 : i32
    return %c0_i32, %c0_i32_0 : i32, i32
  }
  func.func @transform_8(%arg0: i32) -> (i32, i32) {
    %c0_i32 = arith.constant 0 : i32
    %c0_i32_0 = arith.constant 0 : i32
    %c0_i32_1 = arith.constant 0 : i32
    return %c0_i32, %c0_i32_0 : i32, i32
  }
  func.func @transform_9(%arg0: i32) -> (i32, i32) {
    %c0_i32 = arith.constant 0 : i32
    %c0_i32_0 = arith.constant 0 : i32
    %c0_i32_1 = arith.constant 0 : i32
    return %c0_i32, %c0_i32_0 : i32, i32
  }
  func.func @transform_10(%arg0: i32) -> (i32, i32) {
    %c0_i32 = arith.constant 0 : i32
    %c0_i32_0 = arith.constant 0 : i32
    %c0_i32_1 = arith.constant 0 : i32
    return %c0_i32, %c0_i32_0 : i32, i32
  }
  func.func @transform_11(%arg0: i32) -> (i32, i32) {
    %c0_i32 = arith.constant 0 : i32
    %c0_i32_0 = arith.constant 0 : i32
    %c0_i32_1 = arith.constant 0 : i32
    return %c0_i32, %c0_i32_0 : i32, i32
  }
  func.func @transform_12(%arg0: i32) -> (i32, i32, i32) {
    %c0_i32 = arith.constant 0 : i32
    %c0_i32_0 = arith.constant 0 : i32
    %c0_i32_1 = arith.constant 0 : i32
    return %arg0, %c0_i32, %c0_i32_0 : i32, i32, i32
  }
  func.func @transform_13(%arg0: i32) -> (i32, i32, i32) {
    %c0_i32 = arith.constant 0 : i32
    %c0_i32_0 = arith.constant 0 : i32
    %c0_i32_1 = arith.constant 0 : i32
    return %arg0, %c0_i32, %c0_i32_0 : i32, i32, i32
  }
}

</mosaic_0001>

<llo_original>
// kernel: tpu_custom_call.1
$region0: #{tpu_custom_call.1}
  #allocation0 [shape = 'u32[]', space=smem, size = 0x4, offset = 0x4, fixed_abs, tag = 'smem constant byte address 0x4 - core index']
  #allocation1 [shape = 'u32[72,128]{1,0:T(1,128)}', space=vmem, size = 0x9000, scoped, tag = 'internal scratch']
  %s0 = inlined_call_operand.hbm [shape: bf16[2,64,64], index: 0, kind: input, shape index: {}]
  %s1 = inlined_call_operand.hbm [shape: bf16[2,64,64], index: 1, kind: input, shape index: {}]
  %s2 = inlined_call_operand.vmem [shape: bf16[2,32,64], index: 2, kind: input, shape index: {}]
  %s3 = inlined_call_operand.hbm [shape: bf16[2,32,32], index: 3, kind: input, shape index: {}]
  %s4 = inlined_call_operand.hbm [shape: bf16[64,128], index: 4, kind: input, shape index: {}]
  %s5 = inlined_call_operand.vmem [shape: f32[1,128], index: 5, kind: input, shape index: {}]
  %s6 = inlined_call_operand.hbm [shape: bf16[64,64], index: 6, kind: input, shape index: {}]
  %s7 = inlined_call_operand.vmem [shape: f32[1,64], index: 7, kind: input, shape index: {}]
  %s8 = inlined_call_operand.hbm [shape: bf16[64,64], index: 8, kind: input, shape index: {}]
  %s9 = inlined_call_operand.vmem [shape: f32[1,64], index: 9, kind: input, shape index: {}]
  %s10 = inlined_call_operand.vmem [shape: bf16[64,3], index: 10, kind: input, shape index: {}]
  %s11 = inlined_call_operand.vmem [shape: f32[1,3], index: 11, kind: input, shape index: {}]
  %s12 = inlined_call_operand.hbm [shape: f32[2,4,128], index: 12, kind: output, shape index: {0}]
  %s13 = inlined_call_operand.hbm [shape: bf16[2,16,256], index: 13, kind: output, shape index: {1}]
  %14 = xla_tuple %s12, %s13
  %s15 = sld [smem:[#allocation0]]
  $region113: #{tpu_custom_call.1} parent=0
    _
  %s17 = ssub.s32 1, %s15
  %s18 = scalar_select 0, %s17, %s15
  $region1: #{tpu_custom_call.1} parent=0
    #allocation2 [shape = 'u8[32768]{0}', space=vmem, size = 0x8000, scoped, tag = 'input window, operand 0']
    #allocation3 [shape = 's32[2]{0}', space=sflag, size = 0x8, scoped, tag = 'scoped memory for tpu_custom_call.1']
    #allocation4 [shape = 's32[2]{0}', space=sflag, size = 0x8, scoped, tag = 'scoped memory for tpu_custom_call.1']
    #allocation5 [shape = 'u8[32768]{0}', space=vmem, size = 0x8000, scoped, tag = 'input window, operand 1']
    #allocation6 [shape = 's32[2]{0}', space=sflag, size = 0x8, scoped, tag = 'scoped memory for tpu_custom_call.1']
    #allocation7 [shape = 'u8[16384]{0}', space=vmem, size = 0x4000, scoped, tag = 'input window, operand 3']
    #allocation8 [shape = 'u8[16384]{0}', space=vmem, size = 0x4000, scoped, tag = 'input window, operand 4, single buffered']
    #allocation9 [shape = 's32[1]{0}', space=sflag, size = 0x4, scoped, tag = 'scoped memory for tpu_custom_call.1']
    #allocation10 [shape = 'u8[16384]{0}', space=vmem, size = 0x4000, scoped, tag = 'input window, operand 6, single buffered']
    #allocation11 [shape = 'u8[16384]{0}', space=vmem, size = 0x4000, scoped, tag = 'input window, operand 8, single buffered']
    #allocation12 [shape = 's32[1]{0}', space=sflag, size = 0x4, scoped, tag = 'scoped memory for tpu_custom_call.1']
    #allocation13 [shape = 'u8[4096]{0}', space=vmem, size = 0x1000, scoped, tag = 'output window, operand 0']
    #allocation14 [shape = 'u8[16384]{0}', space=vmem, size = 0x4000, scoped, tag = 'output window, operand 1']
    #allocation15 [shape = 's32[2]{0}', space=sflag, size = 0x8, scoped, tag = 'scoped memory for tpu_custom_call.1']
    %19 = vsyncpa [#allocation3], 0
    %s20 = scalar_lea.sflag [#allocation3], 1
    %21 = vsyncpa %s20, 0
    %22 = vsyncpa [#allocation6], 0
    %s23 = scalar_lea.sflag [#allocation6], 1
    %24 = vsyncpa %s23, 0
    %25 = vsyncpa [#allocation9], 0
    %26 = vsyncpa [#allocation12], 0
    %27 = vsyncpa [#allocation4], 0
    %s28 = scalar_lea.sflag [#allocation4], 1
    %29 = vsyncpa %s28, 0
    %30 = vsyncpa [#allocation15], 0
    %s31 = scalar_lea.sflag [#allocation15], 1
    %32 = vsyncpa %s31, 0
    loop: start=0, step=1, limit=4
    $region2: #{tpu_custom_call.1} parent=1 // loop_pre_header
      _
    $region3: #{tpu_custom_call.1} parent=1 // loop_header
      %s34 = sphi 0, %s38
      %p35 = scmp.ge.s32.totalorder %s34, 4
      %s44 = sphi 0, %s46
      %s47 = sphi 0, %s44
      %s48 = sphi 0, %s47
      %s64 = sphi 0, %s48
      %s70 = sphi 0, %s72
      %s73 = sphi 0, %s70
      %s74 = sphi 0, %s73
      %s90 = sphi 0, %s74
      %s96 = sphi 0, %s98
      %s99 = sphi 0, %s96
      %s100 = sphi 0, %s99
      %s116 = sphi 0, %s100
      %s122 = sphi 0, %s124
      %s125 = sphi 0, %s122
      %s126 = sphi 0, %s125
      %s142 = sphi 0, %s126
      %s146 = sphi 0, %s146
      %s148 = sphi 0, %s146
      %s149 = sphi 0, %s148
      %s163 = sphi 0, %s149
      %s167 = sphi 0, %s167
      %s169 = sphi 0, %s167
      %s170 = sphi 0, %s169
      %s184 = sphi 0, %s170
      %s188 = sphi 0, %s188
      %s190 = sphi 0, %s188
      %s191 = sphi 0, %s190
      %s205 = sphi 0, %s191
      %s209 = sphi 0, %s209
      %s211 = sphi 0, %s209
      %s212 = sphi 0, %s211
      %s226 = sphi 0, %s212
      %s230 = sphi 0, %s230
      %s232 = sphi 0, %s230
      %s233 = sphi 0, %s232
      %s247 = sphi 0, %s233
      %s251 = sphi 0, %s251
      %s253 = sphi 0, %s251
      %s254 = sphi 0, %s253
      %s268 = sphi 0, %s254
      %s272 = sphi 0, %s272
      %s274 = sphi 0, %s272
      %s275 = sphi 0, %s274
      %s289 = sphi 0, %s275
      %s293 = sphi 0, %s293
      %s295 = sphi 0, %s293
      %s296 = sphi 0, %s295
      %s310 = sphi 0, %s296
      %s316 = sphi 0, %s318
      %s319 = sphi 0, %s316
      %s320 = sphi 0, %s319
      %s336 = sphi 0, %s320
      %s342 = sphi 0, %s344
      %s345 = sphi 0, %s342
      %s346 = sphi 0, %s345
      %s362 = sphi 0, %s346
    $region4: #{tpu_custom_call.1} parent=1 // loop_header_branch
      %37 = sbr.rel (%p35) target = $region8
    $region5: #{tpu_custom_call.1} parent=1 // loop_body
      %s39 = ssub.s32 %s34, 1
      %s40 = ssub.s32 %s34, 2
      %s41 = sadd.s32 %s34, 1
      %s42 = ssub.s32 %s34, %s41
      %p43 = scmp.eq.s32.totalorder %s42, 0
      %s45 = sadd.s32 %s44, 1
      %s46 = scalar_select %p43, %s44, %s45
      %p49 = pneg %p43
      %p50 = scmp.eq.s32.totalorder %s34, 1
      %p51 = por %p49, %p50
      %p52 = scmp.ne.s32.totalorder %s44, %s47
      %p53 = scmp.eq.s32.totalorder %s34, 0
      %p54 = por %p52, %p53
      %p55 = scmp.ne.s32.totalorder %s44, %s47
      %p56 = scmp.eq.s32.totalorder %s39, 1
      %p57 = por %p55, %p56
      %p58 = scmp.ne.s32.totalorder %s47, %s48
      %p59 = scmp.eq.s32.totalorder %s39, 0
      %p60 = por %p58, %p59
      %p61 = scmp.ne.s32.totalorder %s47, %s48
      %p62 = scmp.eq.s32.totalorder %s40, 1
      %p63 = por %p61, %p62
      %p65 = scmp.ne.s32.totalorder %s48, %s64
      %p66 = scmp.eq.s32.totalorder %s40, 0
      %p67 = por %p65, %p66
      %s68 = ssub.s32 %s34, %s41
      %p69 = scmp.eq.s32.totalorder %s68, 0
      %s71 = sadd.s32 %s70, 1
      %s72 = scalar_select %p69, %s70, %s71
      %p75 = pneg %p69
      %p76 = scmp.eq.s32.totalorder %s34, 1
      %p77 = por %p75, %p76
      %p78 = scmp.ne.s32.totalorder %s70, %s73
      %p79 = scmp.eq.s32.totalorder %s34, 0
      %p80 = por %p78, %p79
      %p81 = scmp.ne.s32.totalorder %s70, %s73
      %p82 = scmp.eq.s32.totalorder %s39, 1
      %p83 = por %p81, %p82
      %p84 = scmp.ne.s32.totalorder %s73, %s74
      %p85 = scmp.eq.s32.totalorder %s39, 0
      %p86 = por %p84, %p85
      %p87 = scmp.ne.s32.totalorder %s73, %s74
      %p88 = scmp.eq.s32.totalorder %s40, 1
      %p89 = por %p87, %p88
      %p91 = scmp.ne.s32.totalorder %s74, %s90
      %p92 = scmp.eq.s32.totalorder %s40, 0
      %p93 = por %p91, %p92
      %s94 = ssub.s32 %s34, %s41
      %p95 = scmp.eq.s32.totalorder %s94, 0
      %s97 = sadd.s32 %s96, 1
      %s98 = scalar_select %p95, %s96, %s97
      %p101 = pneg %p95
      %p102 = scmp.eq.s32.totalorder %s34, 1
      %p103 = por %p101, %p102
      %p104 = scmp.ne.s32.totalorder %s96, %s99
      %p105 = scmp.eq.s32.totalorder %s34, 0
      %p106 = por %p104, %p105
      %p107 = scmp.ne.s32.totalorder %s96, %s99
      %p108 = scmp.eq.s32.totalorder %s39, 1
      %p109 = por %p107, %p108
      %p110 = scmp.ne.s32.totalorder %s99, %s100
      %p111 = scmp.eq.s32.totalorder %s39, 0
      %p112 = por %p110, %p111
      %p113 = scmp.ne.s32.totalorder %s99, %s100
      %p114 = scmp.eq.s32.totalorder %s40, 1
      %p115 = por %p113, %p114
      %p117 = scmp.ne.s32.totalorder %s100, %s116
      %p118 = scmp.eq.s32.totalorder %s40, 0
      %p119 = por %p117, %p118
      %s120 = ssub.s32 %s34, %s41
      %p121 = scmp.eq.s32.totalorder %s120, 0
      %s123 = sadd.s32 %s122, 1
      %s124 = scalar_select %p121, %s122, %s123
      %p127 = pneg %p121
      %p128 = scmp.eq.s32.totalorder %s34, 1
      %p129 = por %p127, %p128
      %p130 = scmp.ne.s32.totalorder %s122, %s125
      %p131 = scmp.eq.s32.totalorder %s34, 0
      %p132 = por %p130, %p131
      %p133 = scmp.ne.s32.totalorder %s122, %s125
      %p134 = scmp.eq.s32.totalorder %s39, 1
      %p135 = por %p133, %p134
      %p136 = scmp.ne.s32.totalorder %s125, %s126
      %p137 = scmp.eq.s32.totalorder %s39, 0
      %p138 = por %p136, %p137
      %p139 = scmp.ne.s32.totalorder %s125, %s126
      %p140 = scmp.eq.s32.totalorder %s40, 1
      %p141 = por %p139, %p140
      %p143 = scmp.ne.s32.totalorder %s126, %s142
      %p144 = scmp.eq.s32.totalorder %s40, 0
      %p145 = por %p143, %p144
      %s147 = sadd.s32 %s146, 1
      %p150 = scmp.eq.s32.totalorder %s34, 1
      %p151 = scmp.ne.s32.totalorder %s146, %s148
      %p152 = scmp.eq.s32.totalorder %s34, 0
      %p153 = por %p151, %p152
      %p154 = scmp.ne.s32.totalorder %s146, %s148
      %p155 = scmp.eq.s32.totalorder %s39, 1
      %p156 = por %p154, %p155
      %p157 = scmp.ne.s32.totalorder %s148, %s149
      %p158 = scmp.eq.s32.totalorder %s39, 0
      %p159 = por %p157, %p158
      %p160 = scmp.ne.s32.totalorder %s148, %s149
      %p161 = scmp.eq.s32.totalorder %s40, 1
      %p162 = por %p160, %p161
      %p164 = scmp.ne.s32.totalorder %s149, %s163
      %p165 = scmp.eq.s32.totalorder %s40, 0
      %p166 = por %p164, %p165
      %s168 = sadd.s32 %s167, 1
      %p171 = scmp.eq.s32.totalorder %s34, 1
      %p172 = scmp.ne.s32.totalorder %s167, %s169
      %p173 = scmp.eq.s32.totalorder %s34, 0
      %p174 = por %p172, %p173
      %p175 = scmp.ne.s32.totalorder %s167, %s169
      %p176 = scmp.eq.s32.totalorder %s39, 1
      %p177 = por %p175, %p176
      %p178 = scmp.ne.s32.totalorder %s169, %s170
      %p179 = scmp.eq.s32.totalorder %s39, 0
      %p180 = por %p178, %p179
      %p181 = scmp.ne.s32.totalorder %s169, %s170
      %p182 = scmp.eq.s32.totalorder %s40, 1
      %p183 = por %p181, %p182
      %p185 = scmp.ne.s32.totalorder %s170, %s184
      %p186 = scmp.eq.s32.totalorder %s40, 0
      %p187 = por %p185, %p186
      %s189 = sadd.s32 %s188, 1
      %p192 = scmp.eq.s32.totalorder %s34, 1
      %p193 = scmp.ne.s32.totalorder %s188, %s190
      %p194 = scmp.eq.s32.totalorder %s34, 0
      %p195 = por %p193, %p194
      %p196 = scmp.ne.s32.totalorder %s188, %s190
      %p197 = scmp.eq.s32.totalorder %s39, 1
      %p198 = por %p196, %p197
      %p199 = scmp.ne.s32.totalorder %s190, %s191
      %p200 = scmp.eq.s32.totalorder %s39, 0
      %p201 = por %p199, %p200
      %p202 = scmp.ne.s32.totalorder %s190, %s191
      %p203 = scmp.eq.s32.totalorder %s40, 1
      %p204 = por %p202, %p203
      %p206 = scmp.ne.s32.totalorder %s191, %s205
      %p207 = scmp.eq.s32.totalorder %s40, 0
      %p208 = por %p206, %p207
      %s210 = sadd.s32 %s209, 1
      %p213 = scmp.eq.s32.totalorder %s34, 1
      %p214 = scmp.ne.s32.totalorder %s209, %s211
      %p215 = scmp.eq.s32.totalorder %s34, 0
      %p216 = por %p214, %p215
      %p217 = scmp.ne.s32.totalorder %s209, %s211
      %p218 = scmp.eq.s32.totalorder %s39, 1
      %p219 = por %p217, %p218
      %p220 = scmp.ne.s32.totalorder %s211, %s212
      %p221 = scmp.eq.s32.totalorder %s39, 0
      %p222 = por %p220, %p221
      %p223 = scmp.ne.s32.totalorder %s211, %s212
      %p224 = scmp.eq.s32.totalorder %s40, 1
      %p225 = por %p223, %p224
      %p227 = scmp.ne.s32.totalorder %s212, %s226
      %p228 = scmp.eq.s32.totalorder %s40, 0
      %p229 = por %p227, %p228
      %s231 = sadd.s32 %s230, 1
      %p234 = scmp.eq.s32.totalorder %s34, 1
      %p235 = scmp.ne.s32.totalorder %s230, %s232
      %p236 = scmp.eq.s32.totalorder %s34, 0
      %p237 = por %p235, %p236
      %p238 = scmp.ne.s32.totalorder %s230, %s232
      %p239 = scmp.eq.s32.totalorder %s39, 1
      %p240 = por %p238, %p239
      %p241 = scmp.ne.s32.totalorder %s232, %s233
      %p242 = scmp.eq.s32.totalorder %s39, 0
      %p243 = por %p241, %p242
      %p244 = scmp.ne.s32.totalorder %s232, %s233
      %p245 = scmp.eq.s32.totalorder %s40, 1
      %p246 = por %p244, %p245
      %p248 = scmp.ne.s32.totalorder %s233, %s247
      %p249 = scmp.eq.s32.totalorder %s40, 0
      %p250 = por %p248, %p249
      %s252 = sadd.s32 %s251, 1
      %p255 = scmp.eq.s32.totalorder %s34, 1
      %p256 = scmp.ne.s32.totalorder %s251, %s253
      %p257 = scmp.eq.s32.totalorder %s34, 0
      %p258 = por %p256, %p257
      %p259 = scmp.ne.s32.totalorder %s251, %s253
      %p260 = scmp.eq.s32.totalorder %s39, 1
      %p261 = por %p259, %p260
      %p262 = scmp.ne.s32.totalorder %s253, %s254
      %p263 = scmp.eq.s32.totalorder %s39, 0
      %p264 = por %p262, %p263
      %p265 = scmp.ne.s32.totalorder %s253, %s254
      %p266 = scmp.eq.s32.totalorder %s40, 1
      %p267 = por %p265, %p266
      %p269 = scmp.ne.s32.totalorder %s254, %s268
      %p270 = scmp.eq.s32.totalorder %s40, 0
      %p271 = por %p269, %p270
      %s273 = sadd.s32 %s272, 1
      %p276 = scmp.eq.s32.totalorder %s34, 1
      %p277 = scmp.ne.s32.totalorder %s272, %s274
      %p278 = scmp.eq.s32.totalorder %s34, 0
      %p279 = por %p277, %p278
      %p280 = scmp.ne.s32.totalorder %s272, %s274
      %p281 = scmp.eq.s32.totalorder %s39, 1
      %p282 = por %p280, %p281
      %p283 = scmp.ne.s32.totalorder %s274, %s275
      %p284 = scmp.eq.s32.totalorder %s39, 0
      %p285 = por %p283, %p284
      %p286 = scmp.ne.s32.totalorder %s274, %s275
      %p287 = scmp.eq.s32.totalorder %s40, 1
      %p288 = por %p286, %p287
      %p290 = scmp.ne.s32.totalorder %s275, %s289
      %p291 = scmp.eq.s32.totalorder %s40, 0
      %p292 = por %p290, %p291
      %s294 = sadd.s32 %s293, 1
      %p297 = scmp.eq.s32.totalorder %s34, 1
      %p298 = scmp.ne.s32.totalorder %s293, %s295
      %p299 = scmp.eq.s32.totalorder %s34, 0
      %p300 = por %p298, %p299
      %p301 = scmp.ne.s32.totalorder %s293, %s295
      %p302 = scmp.eq.s32.totalorder %s39, 1
      %p303 = por %p301, %p302
      %p304 = scmp.ne.s32.totalorder %s295, %s296
      %p305 = scmp.eq.s32.totalorder %s39, 0
      %p306 = por %p304, %p305
      %p307 = scmp.ne.s32.totalorder %s295, %s296
      %p308 = scmp.eq.s32.totalorder %s40, 1
      %p309 = por %p307, %p308
      %p311 = scmp.ne.s32.totalorder %s296, %s310
      %p312 = scmp.eq.s32.totalorder %s40, 0
      %p313 = por %p311, %p312
      %s314 = ssub.s32 %s34, %s41
      %p315 = scmp.eq.s32.totalorder %s314, 0
      %s317 = sadd.s32 %s316, 1
      %s318 = scalar_select %p315, %s316, %s317
      %p321 = pneg %p315
      %p322 = scmp.eq.s32.totalorder %s34, 1
      %p323 = por %p321, %p322
      %p324 = scmp.ne.s32.totalorder %s316, %s319
      %p325 = scmp.eq.s32.totalorder %s34, 0
      %p326 = por %p324, %p325
      %p327 = scmp.ne.s32.totalorder %s316, %s319
      %p328 = scmp.eq.s32.totalorder %s39, 1
      %p329 = por %p327, %p328
      %p330 = scmp.ne.s32.totalorder %s319, %s320
      %p331 = scmp.eq.s32.totalorder %s39, 0
      %p332 = por %p330, %p331
      %p333 = scmp.ne.s32.totalorder %s319, %s320
      %p334 = scmp.eq.s32.totalorder %s40, 1
      %p335 = por %p333, %p334
      %p337 = scmp.ne.s32.totalorder %s320, %s336
      %p338 = scmp.eq.s32.totalorder %s40, 0
      %p339 = por %p337, %p338
      %s340 = ssub.s32 %s34, %s41
      %p341 = scmp.eq.s32.totalorder %s340, 0
      %s343 = sadd.s32 %s342, 1
      %s344 = scalar_select %p341, %s342, %s343
      %p347 = pneg %p341
      %p348 = scmp.eq.s32.totalorder %s34, 1
      %p349 = por %p347, %p348
      %p350 = scmp.ne.s32.totalorder %s342, %s345
      %p351 = scmp.eq.s32.totalorder %s34, 0
      %p352 = por %p350, %p351
      %p353 = scmp.ne.s32.totalorder %s342, %s345
      %p354 = scmp.eq.s32.totalorder %s39, 1
      %p355 = por %p353, %p354
      %p356 = scmp.ne.s32.totalorder %s345, %s346
      %p357 = scmp.eq.s32.totalorder %s39, 0
      %p358 = por %p356, %p357
      %p359 = scmp.ne.s32.totalorder %s345, %s346
      %p360 = scmp.eq.s32.totalorder %s40, 1
      %p361 = por %p359, %p360
      %p363 = scmp.ne.s32.totalorder %s346, %s362
      %p364 = scmp.eq.s32.totalorder %s40, 0
      %p365 = por %p363, %p364
      %p366 = scmp.le.s32.totalorder 1, %s34
      %p367 = scmp.lt.s32.totalorder %s34, 3
      %p368 = pnand %p366, %p367
      %p369 = pneg %p368
      // Predicated region
      $region9: #{tpu_custom_call.1} parent=5 // pred_check
        _
      $region10: #{tpu_custom_call.1} parent=5 // pred_check_branch
        %371 = sbr.rel (%p368) target = $region12
      $region11: #{tpu_custom_call.1} parent=5 // pred_region
        %s372 = ssub.s32 %s34, 1
        // Predicated region
        $region13: #{tpu_custom_call.1} parent=11 // pred_check
          %p373 = pneg %p159
        $region14: #{tpu_custom_call.1} parent=11 // pred_check_branch
          %375 = sbr.rel (%p373) target = $region16
        $region15: #{tpu_custom_call.1} parent=11 // pred_region
          %377 = vsyncadd [#allocation9], 0
          %s378 = sshll.u32 %s4, 4
          %s379 = int_to_ptr.hbm [resolvable:$true] %s378
          %s380 = sshll.u32 [#allocation8], 4
          %s381 = int_to_ptr.vmem [resolvable:$true] %s380
          %386 = dma.hbm_to_vmem [thread:$0]  %s379, 512, %s381, [#allocation9], 64, 64, 4
        $region16: #{tpu_custom_call.1} parent=11 // pred_fallthru
          _
        // Predicated region
        $region17: #{tpu_custom_call.1} parent=11 // pred_check
          %p387 = pneg %p180
        $region18: #{tpu_custom_call.1} parent=11 // pred_check_branch
          %389 = sbr.rel (%p387) target = $region20
        $region19: #{tpu_custom_call.1} parent=11 // pred_region
          _
        $region20: #{tpu_custom_call.1} parent=11 // pred_fallthru
          _
        // Predicated region
        $region21: #{tpu_custom_call.1} parent=11 // pred_check
          %p390 = pneg %p201
        $region22: #{tpu_custom_call.1} parent=11 // pred_check_branch
          %392 = sbr.rel (%p390) target = $region24
        $region23: #{tpu_custom_call.1} parent=11 // pred_region
          %394 = vsyncadd [#allocation9], 0
          %s395 = sshll.u32 %s6, 4
          %s396 = int_to_ptr.hbm [resolvable:$true] %s395
          %s397 = sshll.u32 [#allocation10], 4
          %s398 = int_to_ptr.vmem [resolvable:$true] %s397
          %403 = dma.hbm_to_vmem [thread:$0]  %s396, 512, %s398, [#allocation9], 64, 64, 4
        $region24: #{tpu_custom_call.1} parent=11 // pred_fallthru
          _
        // Predicated region
        $region25: #{tpu_custom_call.1} parent=11 // pred_check
          %p404 = pneg %p222
        $region26: #{tpu_custom_call.1} parent=11 // pred_check_branch
          %406 = sbr.rel (%p404) target = $region28
        $region27: #{tpu_custom_call.1} parent=11 // pred_region
          _
        $region28: #{tpu_custom_call.1} parent=11 // pred_fallthru
          _
        // Predicated region
        $region29: #{tpu_custom_call.1} parent=11 // pred_check
          %p407 = pneg %p243
        $region30: #{tpu_custom_call.1} parent=11 // pred_check_branch
          %409 = sbr.rel (%p407) target = $region32
        $region31: #{tpu_custom_call.1} parent=11 // pred_region
          %411 = vsyncadd [#allocation12], 0
          %s412 = sshll.u32 %s8, 4
          %s413 = int_to_ptr.hbm [resolvable:$true] %s412
          %s414 = sshll.u32 [#allocation11], 4
          %s415 = int_to_ptr.vmem [resolvable:$true] %s414
          %420 = dma.hbm_to_vmem [thread:$0]  %s413, 512, %s415, [#allocation12], 64, 64, 4
        $region32: #{tpu_custom_call.1} parent=11 // pred_fallthru
          _
        // Predicated region
        $region33: #{tpu_custom_call.1} parent=11 // pred_check
          %p421 = pneg %p264
        $region34: #{tpu_custom_call.1} parent=11 // pred_check_branch
          %423 = sbr.rel (%p421) target = $region36
        $region35: #{tpu_custom_call.1} parent=11 // pred_region
          _
        $region36: #{tpu_custom_call.1} parent=11 // pred_fallthru
          _
        // Predicated region
        $region37: #{tpu_custom_call.1} parent=11 // pred_check
          %p424 = pneg %p285
        $region38: #{tpu_custom_call.1} parent=11 // pred_check_branch
          %426 = sbr.rel (%p424) target = $region40
        $region39: #{tpu_custom_call.1} parent=11 // pred_region
          _
        $region40: #{tpu_custom_call.1} parent=11 // pred_fallthru
          _
        // Predicated region
        $region41: #{tpu_custom_call.1} parent=11 // pred_check
          %p427 = pneg %p306
        $region42: #{tpu_custom_call.1} parent=11 // pred_check_branch
          %429 = sbr.rel (%p427) target = $region44
        $region43: #{tpu_custom_call.1} parent=11 // pred_region
          _
        $region44: #{tpu_custom_call.1} parent=11 // pred_fallthru
          _
      $region12: #{tpu_custom_call.1} parent=5 // pred_fallthru
        _
      %p430 = scmp.lt.s32.totalorder %s34, 2
      // Predicated region
      $region45: #{tpu_custom_call.1} parent=5 // pred_check
        %p431 = pneg %p430
      $region46: #{tpu_custom_call.1} parent=5 // pred_check_branch
        %433 = sbr.rel (%p431) target = $region48
      $region47: #{tpu_custom_call.1} parent=5 // pred_region
        // Predicated region
        $region49: #{tpu_custom_call.1} parent=47 // pred_check
          %p434 = pneg %p54
        $region50: #{tpu_custom_call.1} parent=47 // pred_check_branch
          %436 = sbr.rel (%p434) target = $region52
        $region51: #{tpu_custom_call.1} parent=47 // pred_region
          %s437 = sand.u32 %s44, 1
          %s438 = scalar_lea.sflag [#allocation3], %s437
          %s439 = sand.u32 %s44, 1
          %s440 = smul.addr %s439, 32
          %s441 = scalar_lea.vmem [#allocation2], %s440
          %443 = vsyncadd %s438, 0
          %s444 = smul.addr %s34, 8
          %s445 = smul.addr %s444, 4
          %s446 = scalar_lea.hbm %s0, %s445
          %s447 = sshll.u32 %s446, 4
          %s448 = int_to_ptr.hbm [resolvable:$true] %s447
          %s449 = sshll.u32 %s441, 4
          %s450 = int_to_ptr.vmem [resolvable:$true] %s449
          %455 = dma.hbm_to_vmem [thread:$0]  %s448, 512, %s450, %s438, 64, 64, 4
        $region52: #{tpu_custom_call.1} parent=47 // pred_fallthru
          _
        // Predicated region
        $region53: #{tpu_custom_call.1} parent=47 // pred_check
          %p456 = pneg %p80
        $region54: #{tpu_custom_call.1} parent=47 // pred_check_branch
          %458 = sbr.rel (%p456) target = $region56
        $region55: #{tpu_custom_call.1} parent=47 // pred_region
          %s459 = sand.u32 %s34, 1
          %s460 = scalar_lea.sflag [#allocation6], %s459
          %s461 = sand.u32 %s70, 1
          %s462 = smul.addr %s461, 32
          %s463 = scalar_lea.vmem [#allocation5], %s462
          %465 = vsyncadd %s460, 0
          %s466 = smul.addr %s34, 8
          %s467 = smul.addr %s466, 4
          %s468 = scalar_lea.hbm %s1, %s467
          %s469 = sshll.u32 %s468, 4
          %s470 = int_to_ptr.hbm [resolvable:$true] %s469
          %s471 = sshll.u32 %s463, 4
          %s472 = int_to_ptr.vmem [resolvable:$true] %s471
          %477 = dma.hbm_to_vmem [thread:$0]  %s470, 512, %s472, %s460, 64, 64, 4
        $region56: #{tpu_custom_call.1} parent=47 // pred_fallthru
          _
        // Predicated region
        $region57: #{tpu_custom_call.1} parent=47 // pred_check
          %p478 = pneg %p106
        $region58: #{tpu_custom_call.1} parent=47 // pred_check_branch
          %480 = sbr.rel (%p478) target = $region60
        $region59: #{tpu_custom_call.1} parent=47 // pred_region
          %p481 = scmp.lt.s32.totalorder %s34, 1
          %s482 = scalar_select %p481, %s34, 1
          %s483 = smul.addr %s482, 4
          %s484 = smul.addr %s483, 4
          %s485 = scalar_lea.vmem %s2, %s484
        $region60: #{tpu_custom_call.1} parent=47 // pred_fallthru
          _
        // Predicated region
        $region61: #{tpu_custom_call.1} parent=47 // pred_check
          %p486 = pneg %p132
        $region62: #{tpu_custom_call.1} parent=47 // pred_check_branch
          %488 = sbr.rel (%p486) target = $region64
        $region63: #{tpu_custom_call.1} parent=47 // pred_region
          %s489 = sand.u32 %s34, 1
          %s490 = scalar_lea.sflag [#allocation6], %s489
          %s491 = sand.u32 %s122, 1
          %s492 = smul.addr %s491, 16
          %s493 = scalar_lea.vmem [#allocation7], %s492
          %495 = vsyncadd %s490, 0
          %s496 = smul.addr %s34, 4
          %s497 = smul.addr %s496, 4
          %s498 = scalar_lea.hbm %s3, %s497
          %s499 = sshll.u32 %s498, 4
          %s500 = int_to_ptr.hbm [resolvable:$true] %s499
          %s501 = sshll.u32 %s493, 4
          %s502 = int_to_ptr.vmem [resolvable:$true] %s501
          %507 = dma.hbm_to_vmem [thread:$0]  %s500, 256, %s502, %s490, 64, 64, 4
        $region64: #{tpu_custom_call.1} parent=47 // pred_fallthru
          _
      $region48: #{tpu_custom_call.1} parent=5 // pred_fallthru
        _
      %p508 = scmp.le.s32.totalorder 1, %s34
      %p509 = scmp.lt.s32.totalorder %s34, 3
      %p510 = pnand %p508, %p509
      %p511 = pneg %p510
      // Predicated region
      $region65: #{tpu_custom_call.1} parent=5 // pred_check
        _
      $region66: #{tpu_custom_call.1} parent=5 // pred_check_branch
        %513 = sbr.rel (%p510) target = $region68
      $region67: #{tpu_custom_call.1} parent=5 // pred_region
        %s514 = ssub.s32 %s34, 1
        %s515 = sand.u32 %s47, 1
        %s516 = scalar_lea.sflag [#allocation3], %s515
        %s517 = sand.u32 %s47, 1
        %s518 = smul.addr %s517, 32
        %s519 = scalar_lea.vmem [#allocation2], %s518
        // Predicated region
        $region69: #{tpu_custom_call.1} parent=67 // pred_check
          %p520 = pneg %p60
        $region70: #{tpu_custom_call.1} parent=67 // pred_check_branch
          %522 = sbr.rel (%p520) target = $region72
        $region71: #{tpu_custom_call.1} parent=67 // pred_region
          %524 = dma.done %s516, 512
        $region72: #{tpu_custom_call.1} parent=67 // pred_fallthru
          _
        %s525 = sand.u32 %s39, 1
        %s526 = scalar_lea.sflag [#allocation6], %s525
        %s527 = sand.u32 %s73, 1
        %s528 = smul.addr %s527, 32
        %s529 = scalar_lea.vmem [#allocation5], %s528
        // Predicated region
        $region73: #{tpu_custom_call.1} parent=67 // pred_check
          %p530 = pneg %p86
        $region74: #{tpu_custom_call.1} parent=67 // pred_check_branch
          %532 = sbr.rel (%p530) target = $region76
        $region75: #{tpu_custom_call.1} parent=67 // pred_region
          %534 = dma.done %s526, 512
        $region76: #{tpu_custom_call.1} parent=67 // pred_fallthru
          _
        %s535 = sand.u32 %s39, 1
        %s536 = scalar_lea.sflag [#allocation6], %s535
        %s537 = sand.u32 %s125, 1
        %s538 = smul.addr %s537, 16
        %s539 = scalar_lea.vmem [#allocation7], %s538
        // Predicated region
        $region77: #{tpu_custom_call.1} parent=67 // pred_check
          %p540 = pneg %p138
        $region78: #{tpu_custom_call.1} parent=67 // pred_check_branch
          %542 = sbr.rel (%p540) target = $region80
        $region79: #{tpu_custom_call.1} parent=67 // pred_region
          %544 = dma.done %s536, 256
        $region80: #{tpu_custom_call.1} parent=67 // pred_fallthru
          _
        // Predicated region
        $region81: #{tpu_custom_call.1} parent=67 // pred_check
          %p545 = pneg %p159
        $region82: #{tpu_custom_call.1} parent=67 // pred_check_branch
          %547 = sbr.rel (%p545) target = $region84
        $region83: #{tpu_custom_call.1} parent=67 // pred_region
          %549 = dma.done [#allocation9], 512
        $region84: #{tpu_custom_call.1} parent=67 // pred_fallthru
          _
        // Predicated region
        $region85: #{tpu_custom_call.1} parent=67 // pred_check
          %p550 = pneg %p201
        $region86: #{tpu_custom_call.1} parent=67 // pred_check_branch
          %552 = sbr.rel (%p550) target = $region88
        $region87: #{tpu_custom_call.1} parent=67 // pred_region
          %554 = dma.done [#allocation9], 512
        $region88: #{tpu_custom_call.1} parent=67 // pred_fallthru
          _
        // Predicated region
        $region89: #{tpu_custom_call.1} parent=67 // pred_check
          %p555 = pneg %p243
        $region90: #{tpu_custom_call.1} parent=67 // pred_check_branch
          %557 = sbr.rel (%p555) target = $region92
        $region91: #{tpu_custom_call.1} parent=67 // pred_region
          %559 = dma.done [#allocation12], 512
        $region92: #{tpu_custom_call.1} parent=67 // pred_fallthru
          _
        %s560 = sand.u32 %s47, 1
        %s561 = scalar_lea.sflag [#allocation3], %s560
        %s562 = sand.u32 %s47, 1
        %s563 = smul.addr %s562, 32
        %s564 = scalar_lea.vmem [#allocation2], %s563
        %p565 = pneg %p60
        %p566 = pneg %p57
        %s567 = sand.u32 %s39, 1
        %s568 = scalar_lea.sflag [#allocation6], %s567
        %s569 = sand.u32 %s73, 1
        %s570 = smul.addr %s569, 32
        %s571 = scalar_lea.vmem [#allocation5], %s570
        %p572 = pneg %p86
        %p573 = pneg %p83
        %p574 = scmp.lt.s32.totalorder %s39, 1
        %s575 = scalar_select %p574, %s39, 1
        %s576 = smul.addr %s575, 4
        %s577 = smul.addr %s576, 4
        %s578 = scalar_lea.vmem %s2, %s577
        %p579 = pneg %p112
        %p580 = pneg %p109
        %s581 = sand.u32 %s39, 1
        %s582 = scalar_lea.sflag [#allocation6], %s581
        %s583 = sand.u32 %s125, 1
        %s584 = smul.addr %s583, 16
        %s585 = scalar_lea.vmem [#allocation7], %s584
        %p586 = pneg %p138
        %p587 = pneg %p135
        %p588 = pneg %p159
        %p589 = pneg %p156
        %p590 = pneg %p180
        %p591 = pneg %p177
        %p592 = pneg %p201
        %p593 = pneg %p198
        %p594 = pneg %p222
        %p595 = pneg %p219
        %p596 = pneg %p243
        %p597 = pneg %p240
        %p598 = pneg %p264
        %p599 = pneg %p261
        %p600 = pneg %p285
        %p601 = pneg %p282
        %p602 = pneg %p306
        %p603 = pneg %p303
        %p604 = pneg %p332
        %p605 = pneg %p329
        %s606 = sand.u32 %s319, 1
        %s607 = scalar_lea.sflag [#allocation4], %s606
        %s608 = sand.u32 %s319, 1
        %s609 = smul.addr %s608, 4
        %s610 = scalar_lea.vmem [#allocation13], %s609
        %p611 = pneg %p358
        %p612 = pneg %p355
        %s613 = sand.u32 %s345, 1
        %s614 = scalar_lea.sflag [#allocation15], %s613
        %s615 = sand.u32 %s345, 1
        %s616 = smul.addr %s615, 16
        %s617 = scalar_lea.vmem [#allocation14], %s616
        %p618 = scmp.lt.s32.totalorder %s39, 1
        %s619 = scalar_select %p618, %s39, 1
        %s620 = smul.addr %s619, 4
        %s621 = smul.addr %s620, 4
        %s622 = scalar_lea.vmem %s2, %s621
        %v624 = vld [vmem:[%s519] sm:$0xf]
        %v625 = vld [vmem:[%s519 + $0x4] sm:$0xf]
        %v626 = vld [vmem:[%s519 + $0x8] sm:$0xf]
        %v627 = vld [vmem:[%s519 + $0xc] sm:$0xf]
        %v628 = vld [vmem:[%s519 + $0x10] sm:$0xf]
        %v629 = vld [vmem:[%s519 + $0x14] sm:$0xf]
        %v630 = vld [vmem:[%s519 + $0x18] sm:$0xf]
        %v631 = vld [vmem:[%s519 + $0x1c] sm:$0xf]
        %v632 = vld [vmem:[#allocation8] sm:$0xf]
        %v633 = vld [vmem:[#allocation8 + $0x4] sm:$0xf]
        %v634 = vld [vmem:[#allocation8 + $0x8] sm:$0xf]
        %v635 = vld [vmem:[#allocation8 + $0xc] sm:$0xf]
        %v636 = vld [vmem:[#allocation8 + $0x10] sm:$0xf]
        %v637 = vld [vmem:[#allocation8 + $0x14] sm:$0xf]
        %v638 = vld [vmem:[#allocation8 + $0x18] sm:$0xf]
        %v639 = vld [vmem:[#allocation8 + $0x1c] sm:$0xf]
        %v648 = vunpack.c.l.b16 %v624
        %v649 = vunpack.c.l.b16 %v625
        %v650 = vunpack.c.l.b16 %v626
        %v651 = vunpack.c.l.b16 %v627
        %v652 = vunpack.c.l.b16 %v628
        %v653 = vunpack.c.l.b16 %v629
        %v654 = vunpack.c.l.b16 %v630
        %v655 = vunpack.c.l.b16 %v631
        %v656 = vpack.c.b16 %v649, %v648
        %v657 = vpack.c.b16 %v651, %v650
        %v658 = vpack.c.b16 %v653, %v652
        %v659 = vpack.c.b16 %v655, %v654
        %v668 = vunpack.c.l.b16 %v632
        %v669 = vunpack.c.l.b16 %v633
        %v670 = vunpack.c.l.b16 %v634
        %v671 = vunpack.c.l.b16 %v635
        %v672 = vunpack.c.l.b16 %v636
        %v673 = vunpack.c.l.b16 %v637
        %v674 = vunpack.c.l.b16 %v638
        %v675 = vunpack.c.l.b16 %v639
        %v676 = vpack.c.b16 %v669, %v668
        %v677 = vpack.c.b16 %v671, %v670
        %v678 = vpack.c.b16 %v673, %v672
        %v679 = vpack.c.b16 %v675, %v674
        %vm684 = vcmask 523264
        %v686 = vsel %vm684, %v656, 0
        %v689 = vsel %vm684, %v657, 0
        %v692 = vsel %vm684, %v658, 0
        %v695 = vsel %vm684, %v659, 0
        %697 = vmatpush.bf16.msra.mxu0 0
        %698 = vmatpush.bf16.msra.mxu0 0
        %699 = vmatpush.bf16.msra.mxu0 0
        %700 = vmatpush.bf16.msra.mxu0 0
        %701 = vmatpush.bf16.msra.mxu0 %v679
        %702 = vmatpush.bf16.msra.mxu0 %v678
        %703 = vmatpush.bf16.msra.mxu0 %v677
        %704 = vmatpush.bf16.msra.mxu0 %v676
        %705 = vmatmul.bf16.gmra.mxu0 %v686
        %v706 = vpop.f32.mrf.mxu0
        %v707 = vadd.f32 0.0, %v706
        %v708 = vpop.f32.mrf.mxu0
        %v709 = vadd.f32 0.0, %v708
        %710 = vmatmul.bf16.gmra.mxu0 %v689
        %v711 = vpop.f32.mrf.mxu0
        %v712 = vadd.f32 0.0, %v711
        %v713 = vpop.f32.mrf.mxu0
        %v714 = vadd.f32 0.0, %v713
        %715 = vmatmul.bf16.gmra.mxu0 %v692
        %v716 = vpop.f32.mrf.mxu0
        %v717 = vadd.f32 0.0, %v716
        %v718 = vpop.f32.mrf.mxu0
        %v719 = vadd.f32 0.0, %v718
        %720 = vmatmul.bf16.gmra.mxu0 %v695
        %v721 = vpop.f32.mrf.mxu0
        %v722 = vadd.f32 0.0, %v721
        %v723 = vpop.f32.mrf.mxu0
        %v724 = vadd.f32 0.0, %v723
        %725 = vdwg.mxu0
        %v726 = vpack.c.bf16 %v709, %v707
        %v727 = vpack.c.bf16 %v714, %v712
        %v728 = vpack.c.bf16 %v719, %v717
        %v729 = vpack.c.bf16 %v724, %v722
        %v730 = vld [vmem:[%s622] sm:$0xf]
        %v731 = vld [vmem:[%s622 + $0x4] sm:$0xf]
        %v732 = vld [vmem:[%s622 + $0x8] sm:$0xf]
        %v733 = vld [vmem:[%s622 + $0xc] sm:$0xf]
        %v734 = vld [vmem:[#allocation10] sm:$0xf]
        %v735 = vld [vmem:[#allocation10 + $0x4] sm:$0xf]
        %v736 = vld [vmem:[#allocation10 + $0x8] sm:$0xf]
        %v737 = vld [vmem:[#allocation10 + $0xc] sm:$0xf]
        %v738 = vld [vmem:[#allocation10 + $0x10] sm:$0xf]
        %v739 = vld [vmem:[#allocation10 + $0x14] sm:$0xf]
        %v740 = vld [vmem:[#allocation10 + $0x18] sm:$0xf]
        %v741 = vld [vmem:[#allocation10 + $0x1c] sm:$0xf]
        %v746 = vunpack.c.l.b16 %v730
        %v747 = vunpack.c.l.b16 %v731
        %v748 = vunpack.c.l.b16 %v732
        %v749 = vunpack.c.l.b16 %v733
        %v750 = vpack.c.b16 %v747, %v746
        %v751 = vpack.c.b16 %v749, %v748
        %v760 = vunpack.c.l.b16 %v734
        %v761 = vunpack.c.l.b16 %v735
        %v762 = vunpack.c.l.b16 %v736
        %v763 = vunpack.c.l.b16 %v737
        %v764 = vunpack.c.l.b16 %v738
        %v765 = vunpack.c.l.b16 %v739
        %v766 = vunpack.c.l.b16 %v740
        %v767 = vunpack.c.l.b16 %v741
        %v768 = vpack.c.b16 %v761, %v760
        %v769 = vpack.c.b16 %v763, %v762
        %v770 = vpack.c.b16 %v765, %v764
        %v771 = vpack.c.b16 %v767, %v766
        %v777 = vsel %vm684, %v750, 0
        %v780 = vsel %vm684, %v751, 0
        %782 = vmatpush.bf16.msra.mxu0 0
        %783 = vmatpush.bf16.msra.mxu0 0
        %784 = vmatpush.bf16.msra.mxu0 0
        %785 = vmatpush.bf16.msra.mxu0 0
        %786 = vmatpush.bf16.msra.mxu0 %v771
        %787 = vmatpush.bf16.msra.mxu0 %v770
        %788 = vmatpush.bf16.msra.mxu0 %v769
        %789 = vmatpush.bf16.msra.mxu0 %v768
        %790 = vmatmul.bf16.gmra.mxu0 %v777
        %v791 = vpop.f32.mrf.mxu0
        %v792 = vadd.f32 0.0, %v791
        %v793 = vpop.f32.mrf.mxu0
        %v794 = vadd.f32 0.0, %v793
        %795 = vmatmul.bf16.gmra.mxu0 %v780
        %v796 = vpop.f32.mrf.mxu0
        %v797 = vadd.f32 0.0, %v796
        %v798 = vpop.f32.mrf.mxu0
        %v799 = vadd.f32 0.0, %v798
        %800 = vdwg.mxu0
        %v801 = vpack.c.bf16 %v794, %v792
        %v802 = vpack.c.bf16 %v799, %v797
        %v803 = vld [vmem:[%s529] sm:$0xf]
        %v804 = vld [vmem:[%s529 + $0x4] sm:$0xf]
        %v805 = vld [vmem:[%s529 + $0x8] sm:$0xf]
        %v806 = vld [vmem:[%s529 + $0xc] sm:$0xf]
        %v807 = vld [vmem:[%s529 + $0x10] sm:$0xf]
        %v808 = vld [vmem:[%s529 + $0x14] sm:$0xf]
        %v809 = vld [vmem:[%s529 + $0x18] sm:$0xf]
        %v810 = vld [vmem:[%s529 + $0x1c] sm:$0xf]
        %v811 = vld [vmem:[%s539] sm:$0xf]
        %v812 = vld [vmem:[%s539 + $0x4] sm:$0xf]
        %v813 = vld [vmem:[%s539 + $0x8] sm:$0xf]
        %v814 = vld [vmem:[%s539 + $0xc] sm:$0xf]
        %v815 = vunpack.c.l.bf16 %v803
        %v816 = vunpack.c.l.bf16 %v804
        %v817 = vunpack.c.l.bf16 %v805
        %v818 = vunpack.c.l.bf16 %v806
        %v819 = vunpack.c.l.bf16 %v807
        %v820 = vunpack.c.l.bf16 %v808
        %v821 = vunpack.c.l.bf16 %v809
        %v822 = vunpack.c.l.bf16 %v810
        %v823 = vsel %vm684, %v815, 0.0
        %824 = vadd.xlane.f32.xlu0 %v823
        %v825 = vpop.xlane.xlu0 %824
        %v826 = vsel %vm684, %v816, 0.0
        %827 = vadd.xlane.f32.xlu0 %v826
        %v828 = vpop.xlane.xlu0 %827
        %v829 = vsel %vm684, %v817, 0.0
        %830 = vadd.xlane.f32.xlu0 %v829
        %v831 = vpop.xlane.xlu0 %830
        %v832 = vsel %vm684, %v818, 0.0
        %833 = vadd.xlane.f32.xlu0 %v832
        %v834 = vpop.xlane.xlu0 %833
        %v835 = vsel %vm684, %v819, 0.0
        %836 = vadd.xlane.f32.xlu0 %v835
        %v837 = vpop.xlane.xlu0 %836
        %v838 = vsel %vm684, %v820, 0.0
        %839 = vadd.xlane.f32.xlu0 %v838
        %v840 = vpop.xlane.xlu0 %839
        %v841 = vsel %vm684, %v821, 0.0
        %842 = vadd.xlane.f32.xlu0 %v841
        %v843 = vpop.xlane.xlu0 %842
        %v844 = vsel %vm684, %v822, 0.0
        %845 = vadd.xlane.f32.xlu0 %v844
        %v846 = vpop.xlane.xlu0 %845
        %v847 = vadd.f32 %v825, 1.0
        %v848 = vadd.f32 %v828, 1.0
        %v849 = vadd.f32 %v831, 1.0
        %v850 = vadd.f32 %v834, 1.0
        %v851 = vadd.f32 %v837, 1.0
        %v852 = vadd.f32 %v840, 1.0
        %v853 = vadd.f32 %v843, 1.0
        %v854 = vadd.f32 %v846, 1.0
        %v855 = vrcp.pop %v847
        %v856 = vrcp.pop %v848
        %v857 = vrcp.pop %v849
        %v858 = vrcp.pop %v850
        %v859 = vrcp.pop %v851
        %v860 = vrcp.pop %v852
        %v861 = vrcp.pop %v853
        %v862 = vrcp.pop %v854
        %v863 = vunpack.c.l.bf16 %v811
        %v864 = vunpack.c.l.bf16 %v812
        %v865 = vunpack.c.l.bf16 %v813
        %v866 = vunpack.c.l.bf16 %v814
        %vm867 = vcmask 261120
        %v868 = vsel %vm867, %v863, 0.0
        %869 = vadd.xlane.f32.xlu0 %v868
        %v870 = vpop.xlane.xlu0 %869
        %v871 = vsel %vm867, %v864, 0.0
        %872 = vadd.xlane.f32.xlu0 %v871
        %v873 = vpop.xlane.xlu0 %872
        %v874 = vsel %vm867, %v865, 0.0
        %875 = vadd.xlane.f32.xlu0 %v874
        %v876 = vpop.xlane.xlu0 %875
        %v877 = vsel %vm867, %v866, 0.0
        %878 = vadd.xlane.f32.xlu0 %v877
        %v879 = vpop.xlane.xlu0 %878
        %v880 = vadd.f32 %v870, 1.0
        %v881 = vadd.f32 %v873, 1.0
        %v882 = vadd.f32 %v876, 1.0
        %v883 = vadd.f32 %v879, 1.0
        %v884 = vrcp.pop %v880
        %v885 = vrcp.pop %v881
        %v886 = vrcp.pop %v882
        %v887 = vrcp.pop %v883
        %v892 = vunpack.c.l.b16 %v811
        %v893 = vunpack.c.l.b16 %v812
        %v894 = vunpack.c.l.b16 %v813
        %v895 = vunpack.c.l.b16 %v814
        %v896 = vpack.c.b16 %v893, %v892
        %v897 = vpack.c.b16 %v895, %v894
        %v899 = vsel %vm867, %v896, 0
        %v902 = vsel %vm867, %v897, 0
        %904 = vmatpush.bf16.msra.mxu0 0
        %905 = vmatpush.bf16.msra.mxu0 0
        %906 = vmatpush.bf16.msra.mxu0 0
        %907 = vmatpush.bf16.msra.mxu0 0
        %908 = vmatpush.bf16.msra.mxu0 0
        %909 = vmatpush.bf16.msra.mxu0 0
        %910 = vmatpush.bf16.msra.mxu0 %v802
        %911 = vmatpush.bf16.msra.mxu0 %v801
        %912 = vmatmul.bf16.gmra.mxu0 %v899
        %v913 = vpop.f32.mrf.mxu0
        %v914 = vadd.f32 0.0, %v913
        %v915 = vpop.f32.mrf.mxu0
        %v916 = vadd.f32 0.0, %v915
        %917 = vmatmul.bf16.gmra.mxu0 %v902
        %v918 = vpop.f32.mrf.mxu0
        %v919 = vadd.f32 0.0, %v918
        %v920 = vpop.f32.mrf.mxu0
        %v921 = vadd.f32 0.0, %v920
        %922 = vdwg.mxu0
        %v923 = vmul.f32 %v914, %v884
        %v924 = vmul.f32 %v916, %v885
        %v925 = vmul.f32 %v919, %v886
        %v926 = vmul.f32 %v921, %v887
        %v927 = vld [vmem:[%s7] sm:$0x1]
        %v929 = vperm.slane %v927, 0
        %v931 = vadd.f32 %v923, %v929
        %v932 = vadd.f32 %v924, %v929
        %v933 = vadd.f32 %v925, %v929
        %v934 = vadd.f32 %v926, %v929
        %v935 = vmax.f32 %v931, 0.0
        %v936 = vmax.f32 %v932, 0.0
        %v937 = vmax.f32 %v933, 0.0
        %v938 = vmax.f32 %v934, 0.0
        %v939 = vsel %vm684, %v935, -inf
        %v940 = vrot.slane %v939, 4
        %v941 = vmax.f32 %v939, %v940
        %v942 = vrot.slane %v941, 2
        %v943 = vmax.f32 %v941, %v942
        %v944 = vrot.slane %v943, 1
        %v945 = vmax.f32 %v943, %v944
        %v946 = vsel %vm684, %v936, -inf
        %v947 = vrot.slane %v946, 4
        %v948 = vmax.f32 %v946, %v947
        %v949 = vrot.slane %v948, 2
        %v950 = vmax.f32 %v948, %v949
        %v951 = vrot.slane %v950, 1
        %v952 = vmax.f32 %v950, %v951
        %v953 = vsel %vm684, %v937, -inf
        %v954 = vrot.slane %v953, 4
        %v955 = vmax.f32 %v953, %v954
        %v956 = vrot.slane %v955, 2
        %v957 = vmax.f32 %v955, %v956
        %v958 = vrot.slane %v957, 1
        %v959 = vmax.f32 %v957, %v958
        %v960 = vsel %vm684, %v938, -inf
        %v961 = vrot.slane %v960, 4
        %v962 = vmax.f32 %v960, %v961
        %v963 = vrot.slane %v962, 2
        %v964 = vmax.f32 %v962, %v963
        %v965 = vrot.slane %v964, 1
        %v966 = vmax.f32 %v964, %v965
        %vm967 = vcmask 1040384
        %v968 = vsel %vm967, %v945, %v952
        %vm969 = vcmask 1041408
        %v970 = vsel %vm969, %v968, %v959
        %vm971 = vcmask 1042432
        %v972 = vsel %vm971, %v970, %v966
        %v973 = vpack.c.bf16 %v972, %v972
        %v974 = vld [vmem:[#allocation11] sm:$0xf]
        %v975 = vld [vmem:[#allocation11 + $0x4] sm:$0xf]
        %v976 = vld [vmem:[#allocation11 + $0x8] sm:$0xf]
        %v977 = vld [vmem:[#allocation11 + $0xc] sm:$0xf]
        %v978 = vld [vmem:[#allocation11 + $0x10] sm:$0xf]
        %v979 = vld [vmem:[#allocation11 + $0x14] sm:$0xf]
        %v980 = vld [vmem:[#allocation11 + $0x18] sm:$0xf]
        %v981 = vld [vmem:[#allocation11 + $0x1c] sm:$0xf]
        %v982 = vld [vmem:[%s9] sm:$0x1]
        %v984 = vperm.slane %v982, 0
        %v994 = vunpack.c.l.b16 %v974
        %v995 = vunpack.c.l.b16 %v975
        %v996 = vunpack.c.l.b16 %v976
        %v997 = vunpack.c.l.b16 %v977
        %v998 = vunpack.c.l.b16 %v978
        %v999 = vunpack.c.l.b16 %v979
        %v1000 = vunpack.c.l.b16 %v980
        %v1001 = vunpack.c.l.b16 %v981
        %v1002 = vpack.c.b16 %v995, %v994
        %v1003 = vpack.c.b16 %v997, %v996
        %v1004 = vpack.c.b16 %v999, %v998
        %v1005 = vpack.c.b16 %v1001, %v1000
        %v1011 = vsel %vm684, %v973, 0
        %1013 = vmatpush.bf16.msra.mxu0 0
        %1014 = vmatpush.bf16.msra.mxu0 0
        %1015 = vmatpush.bf16.msra.mxu0 0
        %1016 = vmatpush.bf16.msra.mxu0 0
        %1017 = vmatpush.bf16.msra.mxu0 %v1005
        %1018 = vmatpush.bf16.msra.mxu0 %v1004
        %1019 = vmatpush.bf16.msra.mxu0 %v1003
        %1020 = vmatpush.bf16.msra.mxu0 %v1002
        %1021 = vmatmul.bf16.gmra.mxu0 %v1011
        %v1022 = vpop.f32.mrf.mxu0
        %v1023 = vadd.f32 %v984, %v1022
        %v1024 = vpop.f32.mrf.mxu0
        %1025 = vdwg.mxu0
        %v1034 = vunpack.c.l.b16 %v803
        %v1035 = vunpack.c.l.b16 %v804
        %v1036 = vunpack.c.l.b16 %v805
        %v1037 = vunpack.c.l.b16 %v806
        %v1038 = vunpack.c.l.b16 %v807
        %v1039 = vunpack.c.l.b16 %v808
        %v1040 = vunpack.c.l.b16 %v809
        %v1041 = vunpack.c.l.b16 %v810
        %v1042 = vpack.c.b16 %v1035, %v1034
        %v1043 = vpack.c.b16 %v1037, %v1036
        %v1044 = vpack.c.b16 %v1039, %v1038
        %v1045 = vpack.c.b16 %v1041, %v1040
        %v1047 = vsel %vm684, %v1042, 0
        %v1050 = vsel %vm684, %v1043, 0
        %v1053 = vsel %vm684, %v1044, 0
        %v1056 = vsel %vm684, %v1045, 0
        %1058 = vmatpush.bf16.msra.mxu0 0
        %1059 = vmatpush.bf16.msra.mxu0 0
        %1060 = vmatpush.bf16.msra.mxu0 0
        %1061 = vmatpush.bf16.msra.mxu0 0
        %1062 = vmatpush.bf16.msra.mxu0 %v729
        %1063 = vmatpush.bf16.msra.mxu0 %v728
        %1064 = vmatpush.bf16.msra.mxu0 %v727
        %1065 = vmatpush.bf16.msra.mxu0 %v726
        %1066 = vmatmul.bf16.gmra.mxu0 %v1047
        %v1067 = vpop.f32.mrf.mxu0
        %v1068 = vadd.f32 0.0, %v1067
        %v1069 = vpop.f32.mrf.mxu0
        %v1070 = vadd.f32 0.0, %v1069
        %1071 = vmatmul.bf16.gmra.mxu0 %v1050
        %v1072 = vpop.f32.mrf.mxu0
        %v1073 = vadd.f32 0.0, %v1072
        %v1074 = vpop.f32.mrf.mxu0
        %v1075 = vadd.f32 0.0, %v1074
        %1076 = vmatmul.bf16.gmra.mxu0 %v1053
        %v1077 = vpop.f32.mrf.mxu0
        %v1078 = vadd.f32 0.0, %v1077
        %v1079 = vpop.f32.mrf.mxu0
        %v1080 = vadd.f32 0.0, %v1079
        %1081 = vmatmul.bf16.gmra.mxu0 %v1056
        %v1082 = vpop.f32.mrf.mxu0
        %v1083 = vadd.f32 0.0, %v1082
        %v1084 = vpop.f32.mrf.mxu0
        %v1085 = vadd.f32 0.0, %v1084
        %1086 = vdwg.mxu0
        %v1087 = vmul.f32 %v1068, %v855
        %v1088 = vmul.f32 %v1070, %v856
        %v1089 = vmul.f32 %v1073, %v857
        %v1090 = vmul.f32 %v1075, %v858
        %v1091 = vmul.f32 %v1078, %v859
        %v1092 = vmul.f32 %v1080, %v860
        %v1093 = vmul.f32 %v1083, %v861
        %v1094 = vmul.f32 %v1085, %v862
        %v1095 = vld [vmem:[%s5] sm:$0x1]
        %v1097 = vperm.slane %v1095, 0
        %v1099 = vadd.f32 %v1087, %v1097
        %v1100 = vadd.f32 %v1088, %v1097
        %v1101 = vadd.f32 %v1089, %v1097
        %v1102 = vadd.f32 %v1090, %v1097
        %v1103 = vadd.f32 %v1091, %v1097
        %v1104 = vadd.f32 %v1092, %v1097
        %v1105 = vadd.f32 %v1093, %v1097
        %v1106 = vadd.f32 %v1094, %v1097
        %v1107 = vtanh.pop %v1099
        %v1108 = vtanh.pop %v1100
        %v1109 = vtanh.pop %v1101
        %v1110 = vtanh.pop %v1102
        %v1111 = vtanh.pop %v1103
        %v1112 = vtanh.pop %v1104
        %v1113 = vtanh.pop %v1105
        %v1114 = vtanh.pop %v1106
        %v1115 = vperm.slane %v1023, 0
        %1117 = vrot.lane.b32.xlu0 %v1115, 64
        %v1118 = vpop.permute.xlu0 %1117
        %v1120 = vadd.f32 %v1099, %v1118
        %v1121 = vadd.f32 %v1100, %v1118
        %v1122 = vmax.f32 %v1120, 0.0
        %v1123 = vmax.f32 %v1121, 0.0
        %1126 = vrot.lane.b32.xlu0 %v1122, 64
        %v1127 = vpop.permute.xlu0 %1126
        %1128 = vrot.lane.b32.xlu0 %v1123, 64
        %v1129 = vpop.permute.xlu0 %1128
        %v1132 = vmul.f32 %v1107, %v1127
        %v1133 = vmul.f32 %v1108, %v1129
        %v1134 = vsel %vm684, %v1132, -inf
        %v1135 = vsel %vm684, %v1133, -inf
        %v1136 = vmax.f32 %v1134, %v1135
        %v1137 = vrot.slane %v1136, 4
        %v1138 = vmax.f32 %v1136, %v1137
        %v1139 = vrot.slane %v1138, 2
        %v1140 = vmax.f32 %v1138, %v1139
        %v1141 = vrot.slane %v1140, 1
        %v1142 = vmax.f32 %v1140, %v1141
        %v1143 = vperm.slane %v1023, 1
        %1145 = vrot.lane.b32.xlu0 %v1143, 64
        %v1146 = vpop.permute.xlu0 %1145
        %v1148 = vadd.f32 %v1101, %v1146
        %v1149 = vadd.f32 %v1102, %v1146
        %v1150 = vmax.f32 %v1148, 0.0
        %v1151 = vmax.f32 %v1149, 0.0
        %1154 = vrot.lane.b32.xlu0 %v1150, 64
        %v1155 = vpop.permute.xlu0 %1154
        %1156 = vrot.lane.b32.xlu0 %v1151, 64
        %v1157 = vpop.permute.xlu0 %1156
        %v1160 = vmul.f32 %v1109, %v1155
        %v1161 = vmul.f32 %v1110, %v1157
        %v1162 = vsel %vm684, %v1160, -inf
        %v1163 = vsel %vm684, %v1161, -inf
        %v1164 = vmax.f32 %v1162, %v1163
        %v1165 = vrot.slane %v1164, 4
        %v1166 = vmax.f32 %v1164, %v1165
        %v1167 = vrot.slane %v1166, 2
        %v1168 = vmax.f32 %v1166, %v1167
        %v1169 = vrot.slane %v1168, 1
        %v1170 = vmax.f32 %v1168, %v1169
        %v1171 = vperm.slane %v1023, 2
        %1173 = vrot.lane.b32.xlu0 %v1171, 64
        %v1174 = vpop.permute.xlu0 %1173
        %v1176 = vadd.f32 %v1103, %v1174
        %v1177 = vadd.f32 %v1104, %v1174
        %v1178 = vmax.f32 %v1176, 0.0
        %v1179 = vmax.f32 %v1177, 0.0
        %1182 = vrot.lane.b32.xlu0 %v1178, 64
        %v1183 = vpop.permute.xlu0 %1182
        %1184 = vrot.lane.b32.xlu0 %v1179, 64
        %v1185 = vpop.permute.xlu0 %1184
        %v1188 = vmul.f32 %v1111, %v1183
        %v1189 = vmul.f32 %v1112, %v1185
        %v1190 = vsel %vm684, %v1188, -inf
        %v1191 = vsel %vm684, %v1189, -inf
        %v1192 = vmax.f32 %v1190, %v1191
        %v1193 = vrot.slane %v1192, 4
        %v1194 = vmax.f32 %v1192, %v1193
        %v1195 = vrot.slane %v1194, 2
        %v1196 = vmax.f32 %v1194, %v1195
        %v1197 = vrot.slane %v1196, 1
        %v1198 = vmax.f32 %v1196, %v1197
        %v1199 = vperm.slane %v1023, 3
        %1201 = vrot.lane.b32.xlu0 %v1199, 64
        %v1202 = vpop.permute.xlu0 %1201
        %v1204 = vadd.f32 %v1105, %v1202
        %v1205 = vadd.f32 %v1106, %v1202
        %v1206 = vmax.f32 %v1204, 0.0
        %v1207 = vmax.f32 %v1205, 0.0
        %1210 = vrot.lane.b32.xlu0 %v1206, 64
        %v1211 = vpop.permute.xlu0 %1210
        %1212 = vrot.lane.b32.xlu0 %v1207, 64
        %v1213 = vpop.permute.xlu0 %1212
        %v1216 = vmul.f32 %v1113, %v1211
        %v1217 = vmul.f32 %v1114, %v1213
        %v1218 = vsel %vm684, %v1216, -inf
        %v1219 = vsel %vm684, %v1217, -inf
        %v1220 = vmax.f32 %v1218, %v1219
        %v1221 = vrot.slane %v1220, 4
        %v1222 = vmax.f32 %v1220, %v1221
        %v1223 = vrot.slane %v1222, 2
        %v1224 = vmax.f32 %v1222, %v1223
        %v1225 = vrot.slane %v1224, 1
        %v1226 = vmax.f32 %v1224, %v1225
        %v1227 = vsel %vm967, %v1142, %v1170
        %v1228 = vsel %vm969, %v1227, %v1198
        %v1229 = vsel %vm971, %v1228, %v1226
        %v1230 = vsel %vm684, %v1127, %v1150
        %v1231 = vsel %vm684, %v1129, %v1151
        %v1232 = vsel %vm684, %v1183, %v1206
        %v1233 = vsel %vm684, %v1185, %v1207
        %v1234 = vpack.c.bf16 %v1232, %v1230
        %v1235 = vpack.c.bf16 %v1233, %v1231
        %1236 = vst [vmem:[%s617] sm:$0xff] %v1234
        %1237 = vst [vmem:[%s617 + $0x8] sm:$0xff] %v1235
        %v1238 = vpack.c.bf16 %v1229, %v1229
        %v1239 = vld [vmem:[%s10] sm:$0xf]
        %v1240 = vld [vmem:[%s10 + $0x4] sm:$0xf]
        %v1241 = vld [vmem:[%s10 + $0x8] sm:$0xf]
        %v1242 = vld [vmem:[%s10 + $0xc] sm:$0xf]
        %v1243 = vld [vmem:[%s10 + $0x10] sm:$0xf]
        %v1244 = vld [vmem:[%s10 + $0x14] sm:$0xf]
        %v1245 = vld [vmem:[%s10 + $0x18] sm:$0xf]
        %v1246 = vld [vmem:[%s10 + $0x1c] sm:$0xf]
        %v1247 = vld [vmem:[%s11] sm:$0x1]
        %v1249 = vperm.slane %v1247, 0
        %v1259 = vunpack.c.l.b16 %v1239
        %v1260 = vunpack.c.l.b16 %v1240
        %v1261 = vunpack.c.l.b16 %v1241
        %v1262 = vunpack.c.l.b16 %v1242
        %v1263 = vunpack.c.l.b16 %v1243
        %v1264 = vunpack.c.l.b16 %v1244
        %v1265 = vunpack.c.l.b16 %v1245
        %v1266 = vunpack.c.l.b16 %v1246
        %v1267 = vpack.c.b16 %v1260, %v1259
        %v1268 = vpack.c.b16 %v1262, %v1261
        %v1269 = vpack.c.b16 %v1264, %v1263
        %v1270 = vpack.c.b16 %v1266, %v1265
        %v1276 = vsel %vm684, %v1238, 0
        %1278 = vmatpush.bf16.msra.mxu0 0
        %1279 = vmatpush.bf16.msra.mxu0 0
        %1280 = vmatpush.bf16.msra.mxu0 0
        %1281 = vmatpush.bf16.msra.mxu0 0
        %1282 = vmatpush.bf16.msra.mxu0 %v1270
        %1283 = vmatpush.bf16.msra.mxu0 %v1269
        %1284 = vmatpush.bf16.msra.mxu0 %v1268
        %1285 = vmatpush.bf16.msra.mxu0 %v1267
        %1286 = vmatmul.bf16.gmra.mxu0 %v1276
        %v1287 = vpop.f32.mrf.mxu0
        %v1288 = vadd.f32 %v1249, %v1287
        %v1289 = vpop.f32.mrf.mxu0
        %1290 = vdwg.mxu0
        %1292 = vrot.lane.b32.xlu0 %v1288, 64
        %v1293 = vpop.permute.xlu0 %1292
        %v1295 = vsel %vm684, %v1229, %v1293
        %vm1296 = vcmask 547840
        %v1297 = vsel %vm1296, %v1295, 0.0
        %1298 = vst [vmem:[%s610] sm:$0xf] %v1297
        %s1299 = sand.u32 %s319, 1
        %s1300 = scalar_lea.sflag [#allocation4], %s1299
        %s1301 = sand.u32 %s319, 1
        %s1302 = smul.addr %s1301, 4
        %s1303 = scalar_lea.vmem [#allocation13], %s1302
        %s1304 = sand.u32 %s345, 1
        %s1305 = scalar_lea.sflag [#allocation15], %s1304
        %s1306 = sand.u32 %s345, 1
        %s1307 = smul.addr %s1306, 16
        %s1308 = scalar_lea.vmem [#allocation14], %s1307
        // Predicated region
        $region93: #{tpu_custom_call.1} parent=67 // pred_check
          %p1309 = pneg %p329
        $region94: #{tpu_custom_call.1} parent=67 // pred_check_branch
          %1311 = sbr.rel (%p1309) target = $region96
        $region95: #{tpu_custom_call.1} parent=67 // pred_region
          %1313 = vsyncadd %s1300, 0
          %s1314 = smul.addr %s39, 4
          %s1315 = scalar_lea.hbm %s12, %s1314
          %s1317 = sshll.u32 %s1303, 4
          %s1318 = int_to_ptr.vmem [resolvable:$true] %s1317
          %s1319 = sshll.u32 %s1315, 4
          %s1320 = int_to_ptr.hbm [resolvable:$true] %s1319
          %1322 = dma.vmem_to_hbm [thread:$0]  %s1318, 64, %s1320, %s1300
        $region96: #{tpu_custom_call.1} parent=67 // pred_fallthru
          _
        // Predicated region
        $region97: #{tpu_custom_call.1} parent=67 // pred_check
          %p1323 = pneg %p355
        $region98: #{tpu_custom_call.1} parent=67 // pred_check_branch
          %1325 = sbr.rel (%p1323) target = $region100
        $region99: #{tpu_custom_call.1} parent=67 // pred_region
          %1327 = vsyncadd %s1305, 0
          %s1328 = smul.addr %s39, 4
          %s1329 = smul.addr %s1328, 4
          %s1330 = scalar_lea.hbm %s13, %s1329
          %s1331 = sshll.u32 %s1308, 4
          %s1332 = int_to_ptr.vmem [resolvable:$true] %s1331
          %s1333 = sshll.u32 %s1330, 4
          %s1334 = int_to_ptr.hbm [resolvable:$true] %s1333
          %1339 = dma.vmem_to_hbm [thread:$0]  %s1332, 256, %s1334, %s1305, 128, 128, 8
        $region100: #{tpu_custom_call.1} parent=67 // pred_fallthru
          _
      $region68: #{tpu_custom_call.1} parent=5 // pred_fallthru
        _
      %p1340 = scmp.le.s32.totalorder 2, %s34
      // Predicated region
      $region101: #{tpu_custom_call.1} parent=5 // pred_check
        %p1341 = pneg %p1340
      $region102: #{tpu_custom_call.1} parent=5 // pred_check_branch
        %1343 = sbr.rel (%p1341) target = $region104
      $region103: #{tpu_custom_call.1} parent=5 // pred_region
        %s1344 = ssub.s32 %s34, 2
        // Predicated region
        $region105: #{tpu_custom_call.1} parent=103 // pred_check
          %p1345 = pneg %p335
        $region106: #{tpu_custom_call.1} parent=103 // pred_check_branch
          %1347 = sbr.rel (%p1345) target = $region108
        $region107: #{tpu_custom_call.1} parent=103 // pred_region
          %s1348 = sand.u32 %s320, 1
          %s1349 = scalar_lea.sflag [#allocation4], %s1348
          %s1350 = sand.u32 %s320, 1
          %s1351 = smul.addr %s1350, 4
          %s1352 = scalar_lea.vmem [#allocation13], %s1351
          %1354 = dma.done %s1349, 64
        $region108: #{tpu_custom_call.1} parent=103 // pred_fallthru
          _
        // Predicated region
        $region109: #{tpu_custom_call.1} parent=103 // pred_check
          %p1355 = pneg %p361
        $region110: #{tpu_custom_call.1} parent=103 // pred_check_branch
          %1357 = sbr.rel (%p1355) target = $region112
        $region111: #{tpu_custom_call.1} parent=103 // pred_region
          %s1358 = sand.u32 %s346, 1
          %s1359 = scalar_lea.sflag [#allocation15], %s1358
          %s1360 = sand.u32 %s346, 1
          %s1361 = smul.addr %s1360, 16
          %s1362 = scalar_lea.vmem [#allocation14], %s1361
          %1364 = dma.done %s1359, 256
        $region112: #{tpu_custom_call.1} parent=103 // pred_fallthru
          _
      $region104: #{tpu_custom_call.1} parent=5 // pred_fallthru
        _
    $region6: #{tpu_custom_call.1} parent=1 // loop_footer
      %s38 = sadd.s32 1, %s34
    $region7: #{tpu_custom_call.1} parent=1 // loop_footer_branch
      %33 = sbr.rel target = $region3
    $region8: #{tpu_custom_call.1} parent=1 // loop_exit
      _
    %1365 = vsyncpa [#allocation3], 1
    %s1366 = scalar_lea.sflag [#allocation3], 1
    %1367 = vsyncpa %s1366, 1
    %1368 = vsyncpa [#allocation6], 1
    %s1369 = scalar_lea.sflag [#allocation6], 1
    %1370 = vsyncpa %s1369, 1
    %1371 = vsyncpa [#allocation9], 1
    %1372 = vsyncpa [#allocation12], 1
    %1373 = vsyncpa [#allocation4], 1
    %s1374 = scalar_lea.sflag [#allocation4], 1
    %1375 = vsyncpa %s1374, 1
    %1376 = vsyncpa [#allocation15], 1
    %s1377 = scalar_lea.sflag [#allocation15], 1
    %1378 = vsyncpa %s1377, 1

</llo_original>
